<compile_context>
chip_gen: v6e
topology: v6e:2x2x1
jax: 0.10.0
libtpu: 0.0.40
codegen_flags: <defaults>
</compile_context>

<pallas_src>
import jax
import jax.numpy as jnp
from jax.experimental import pallas as pl
from jax.experimental.pallas import tpu as pltpu

_VMEM = pl.BlockSpec(memory_space=pltpu.MemorySpace.VMEM)
_SMEM = pl.BlockSpec(memory_space=pltpu.MemorySpace.SMEM)


# -----------------------------------------------------------------------------
# Fused kernel: backbone embed (both images) + L2-normalize + siamese head
# -----------------------------------------------------------------------------
def siamese_kernel(x1_ref, x2_ref, wbb_ref, w1_ref, bw_ref, b2_ref, o_ref):
    # x1_ref/x2_ref: (B, D_in) f32   flattened pixels of img1 / img2
    # wbb_ref      : (D_in, E) bf16  stand-in backbone projection (shared weight)
    # w1_ref       : (2E, H)   bf16  BN-folded Linear(2E->H, bias=False)
    # bw_ref       : (2, H)    f32   row 0 = BN-folded bias b1', row 1 = final weight row
    # b2_ref       : (1,)      f32   final bias (SMEM scalar)
    # o_ref        : (B, 128)  f32   logits broadcast across lanes (lane-dense store)

    def l2norm(v):
        # F.normalize(p=2, dim=1): x / max(||x||, 1e-12) == x * rsqrt(max(sumsq, 1e-24))
        sumsq = jnp.sum(v * v, axis=1, keepdims=True)
        return v * jax.lax.rsqrt(jnp.maximum(sumsq, 1e-24))

    # ---- backbone: shared weight lives in VMEM once; bf16 MXU, f32 accumulation ----
    w_bb = wbb_ref[...]
    e1 = l2norm(jnp.dot(x1_ref[...].astype(jnp.bfloat16), w_bb,
                        preferred_element_type=jnp.float32))
    e2 = l2norm(jnp.dot(x2_ref[...].astype(jnp.bfloat16), w_bb,
                        preferred_element_type=jnp.float32))

    # ---- head: concat(|e1-e2|, e1*e2) along lanes (E % 128 == 0 -> lane-block copy) ----
    diff = jnp.abs(e1 - e2)
    prod = e1 * e2
    hp = jnp.concatenate([diff, prod], axis=1).astype(jnp.bfloat16)        # (B, 2E)
    h = jnp.dot(hp, w1_ref[...], preferred_element_type=jnp.float32)       # (B, H)
    h = h + bw_ref[0:1, :]              # eval-mode BatchNorm folded into w1'/b1'
    h = h * jax.nn.sigmoid(h)           # SiLU; Dropout(0.45) is identity at eval

    # Final Linear(H -> 1) as a lane reduction; broadcast so the store is lane-dense.
    logits = jnp.sum(h * bw_ref[1:2, :], axis=1, keepdims=True) + b2_ref[0]  # (B, 1)
    o_ref[...] = jnp.broadcast_to(logits, o_ref.shape)


# -----------------------------------------------------------------------------
# Parameter prep (offline): BN folding + bf16 weight quantization + ref stacking
# -----------------------------------------------------------------------------
def prepare_params(p, bn_eps=1e-5):
    scale = p["gamma"] * jax.lax.rsqrt(p["var"] + bn_eps)          # (1, H)
    w1_folded = (p["w1"] * scale).astype(jnp.bfloat16)              # (2E, H)
    b1 = p["beta"] - p["mean"] * scale                              # (1, H)
    w2_row = p["w2"][:, 0][None, :]                                 # (1, H)
    return {
        "w_bb": p["w_bb"].astype(jnp.bfloat16),                     # (D_in, E)
        "w1": w1_folded,                                            # (2E, H)
        "bw": jnp.concatenate([b1, w2_row], axis=0).astype(jnp.float32),  # (2, H)
        "b2": p["b2"].reshape(-1).astype(jnp.float32),              # (1,)
    }


def siamese_forward(img1, img2, prep):
    B = img1.shape[0]
    x1 = img1.reshape(B, -1).astype(jnp.float32)     # row-major flatten == torch .view
    x2 = img2.reshape(B, -1).astype(jnp.float32)
    D_in = x1.shape[1]
    E = prep["w_bb"].shape[1]
    Hd = prep["w1"].shape[1]

    flops = 2 * (2 * B * D_in * E) + 2 * (B * 2 * E * Hd) + 8 * B * (E + Hd)
    transcendentals = B * Hd + 2 * B                 # sigmoid + two rsqrt per pair
    bytes_accessed = (prep["w_bb"].size * 2 + prep["w1"].size * 2 + prep["bw"].size * 4
                      + 4 + 2 * B * D_in * 4 + B * 128 * 4)

    out = pl.pallas_call(
        siamese_kernel,
        out_shape=jax.ShapeDtypeStruct((B, 128), jnp.float32),
        in_specs=[_VMEM, _VMEM, _VMEM, _VMEM, _VMEM, _SMEM],
        out_specs=_VMEM,
        compiler_params=pltpu.CompilerParams(vmem_limit_bytes=8 * 1024 * 1024),
        cost_estimate=pl.CostEstimate(flops=flops,
                                      transcendentals=transcendentals,
                                      bytes_accessed=bytes_accessed),
    )(x1, x2, prep["w_bb"], prep["w1"], prep["bw"], prep["b2"])
    return out[:, 0]                                 # .squeeze(1)


# -----------------------------------------------------------------------------
# Pure-JAX references
# -----------------------------------------------------------------------------
def siamese_forward_module_ref(img1, img2, p):
    """Module-faithful f32 path with the original (un-folded, un-quantized) params."""
    def emb(x):
        e = x.reshape(x.shape[0], -1) @ p["w_bb"]
        n = jnp.sqrt(jnp.sum(e * e, axis=1, keepdims=True))
        return e / jnp.maximum(n, 1e-12)
    e1, e2 = emb(img1), emb(img2)
    x = jnp.concatenate([jnp.abs(e1 - e2), e1 * e2], axis=1)
    h = x @ p["w1"]
    h = (h - p["mean"]) * jax.lax.rsqrt(p["var"] + 1e-5) * p["gamma"] + p["beta"]
    h = h * jax.nn.sigmoid(h)
    return (h @ p["w2"] + p["b2"])[:, 0]


def siamese_forward_prepared_ref(img1, img2, prep):
    """Exact-math (f32) reference over the same prepared/quantized params the kernel uses."""
    wbb = prep["w_bb"].astype(jnp.float32)
    w1 = prep["w1"].astype(jnp.float32)
    b1 = prep["bw"][0:1, :]
    w2 = prep["bw"][1:2, :]

    def emb(x):
        xq = x.reshape(x.shape[0], -1).astype(jnp.bfloat16).astype(jnp.float32)
        e = xq @ wbb
        s = jnp.sum(e * e, axis=1, keepdims=True)
        return e * jax.lax.rsqrt(jnp.maximum(s, 1e-24))

    e1, e2 = emb(img1), emb(img2)
    hp = jnp.concatenate([jnp.abs(e1 - e2), e1 * e2], axis=1)
    hp = hp.astype(jnp.bfloat16).astype(jnp.float32)
    h = hp @ w1 + b1
    h = h * jax.nn.sigmoid(h)
    return jnp.sum(h * w2, axis=1) + prep["b2"][0]


if __name__ == "__main__":
    B, C, H, W = 2, 4, 16, 16
    EMBED_DIM, HIDDEN_DIM = 512, 256
    D_IN = C * H * W

    key = jax.random.PRNGKey(0)
    k_img1, k_img2, k_bb, k_w1, k_w2, k_bn = jax.random.split(key, 6)

    img1 = jax.random.normal(k_img1, (B, C, H, W), dtype=jnp.float32)
    img2 = jax.random.normal(k_img2, (B, C, H, W), dtype=jnp.float32)

    params = {
        # TODO(synk): stand-in for the InceptionResnetV1 trunk (facenet_pytorch,
        # ~27M params): a single linear projection of the flattened pixels to 512-d.
        "w_bb": jax.random.normal(k_bb, (D_IN, EMBED_DIM), dtype=jnp.float32) * 0.02,
        # classifier: Linear(2E -> H, bias=False)
        "w1": jax.random.normal(k_w1, (2 * EMBED_DIM, HIDDEN_DIM), dtype=jnp.float32) * 0.02,
        # BatchNorm1d(H) eval-mode params / running stats
        "gamma": jnp.ones((1, HIDDEN_DIM), dtype=jnp.float32),
        "beta": jnp.zeros((1, HIDDEN_DIM), dtype=jnp.float32),
        "mean": 0.01 * jax.random.normal(k_bn, (1, HIDDEN_DIM), dtype=jnp.float32),
        "var": jnp.ones((1, HIDDEN_DIM), dtype=jnp.float32),
        # final Linear(H -> 1)
        "w2": jax.random.normal(k_w2, (HIDDEN_DIM, 1), dtype=jnp.float32) * 0.05,
        "b2": jnp.zeros((1, 1), dtype=jnp.float32),
    }

    prep = prepare_params(params)

    logits = jax.block_until_ready(siamese_forward(img1, img2, prep))
    ref_prepared = jax.block_until_ready(siamese_forward_prepared_ref(img1, img2, prep))
    ref_module = jax.block_until_ready(siamese_forward_module_ref(img1, img2, params))

    assert logits.shape == (B,), logits.shape
    # Kernel vs exact-math reference over the same prepared params (tight).
    assert jnp.allclose(logits, ref_prepared, atol=1e-3, rtol=1e-2), (logits, ref_prepared)
    # Kernel vs the module-faithful f32 path (bf16 weight quantization only, loose).
    assert jnp.allclose(logits, ref_module, atol=1e-2, rtol=5e-2), (logits, ref_module)
    print("KERNEL_OK")
</pallas_src>

<mosaic_0001>
module attributes {stable_mosaic.version = 11 : i64} {
  func.func @siamese_kernel(%arg0: memref<2x1024xf32, #tpu.memory_space<vmem>>, %arg1: memref<2x1024xf32, #tpu.memory_space<vmem>>, %arg2: memref<1024x512xbf16, #tpu.memory_space<vmem>>, %arg3: memref<1024x256xbf16, #tpu.memory_space<vmem>>, %arg4: memref<2x256xf32, #tpu.memory_space<vmem>>, %arg5: memref<1xf32, #tpu.memory_space<smem>>, %arg6: memref<2x128xf32, #tpu.memory_space<vmem>>) attributes {dimension_semantics = [], scalar_prefetch = 0 : i64, scratch_operands = 0 : i64, tpu.core_type = #tpu.core_type<tc>} {
    %c0 = arith.constant 0 : index
    %c0_0 = arith.constant 0 : index
    %0 = vector.load %arg2[%c0, %c0_0] : memref<1024x512xbf16, #tpu.memory_space<vmem>>, vector<1024x512xbf16>
    %c0_1 = arith.constant 0 : index
    %c0_2 = arith.constant 0 : index
    %1 = vector.load %arg0[%c0_1, %c0_2] : memref<2x1024xf32, #tpu.memory_space<vmem>>, vector<2x1024xf32>
    %2 = arith.truncf %1 : vector<2x1024xf32> to vector<2x1024xbf16>
    %cst = arith.constant dense<0.000000e+00> : vector<2x512xf32>
    %3 = tpu.matmul %2, %0, %cst {dimension_numbers = #tpu.dot_dimension_numbers<[1], [0], [0], [1], [0, 0, 1, 1], [], []>} : vector<2x1024xbf16>, vector<1024x512xbf16>, vector<2x512xf32> -> vector<2x512xf32>
    %4 = arith.mulf %3, %3 : vector<2x512xf32>
    %cst_3 = arith.constant dense<0.000000e+00> : vector<2xf32>
    %5 = vector.multi_reduction <add>, %4, %cst_3 [1] : vector<2x512xf32> to vector<2xf32>
    %6 = vector.shape_cast %5 : vector<2xf32> to vector<2x1xf32>
    %cst_4 = arith.constant 1.000000e-24 : f32
    %7 = vector.broadcast %cst_4 : f32 to vector<2x1xf32>
    %8 = arith.maximumf %6, %7 : vector<2x1xf32>
    %9 = math.rsqrt %8 : vector<2x1xf32>
    %10 = vector.broadcast %9 : vector<2x1xf32> to vector<2x512xf32>
    %11 = arith.mulf %3, %10 : vector<2x512xf32>
    %c0_5 = arith.constant 0 : index
    %c0_6 = arith.constant 0 : index
    %12 = vector.load %arg1[%c0_5, %c0_6] : memref<2x1024xf32, #tpu.memory_space<vmem>>, vector<2x1024xf32>
    %13 = arith.truncf %12 : vector<2x1024xf32> to vector<2x1024xbf16>
    %cst_7 = arith.constant dense<0.000000e+00> : vector<2x512xf32>
    %14 = tpu.matmul %13, %0, %cst_7 {dimension_numbers = #tpu.dot_dimension_numbers<[1], [0], [0], [1], [0, 0, 1, 1], [], []>} : vector<2x1024xbf16>, vector<1024x512xbf16>, vector<2x512xf32> -> vector<2x512xf32>
    %15 = arith.mulf %14, %14 : vector<2x512xf32>
    %cst_8 = arith.constant dense<0.000000e+00> : vector<2xf32>
    %16 = vector.multi_reduction <add>, %15, %cst_8 [1] : vector<2x512xf32> to vector<2xf32>
    %17 = vector.shape_cast %16 : vector<2xf32> to vector<2x1xf32>
    %cst_9 = arith.constant 1.000000e-24 : f32
    %18 = vector.broadcast %cst_9 : f32 to vector<2x1xf32>
    %19 = arith.maximumf %17, %18 : vector<2x1xf32>
    %20 = math.rsqrt %19 : vector<2x1xf32>
    %21 = vector.broadcast %20 : vector<2x1xf32> to vector<2x512xf32>
    %22 = arith.mulf %14, %21 : vector<2x512xf32>
    %23 = arith.subf %11, %22 : vector<2x512xf32>
    %24 = math.absf %23 : vector<2x512xf32>
    %25 = arith.mulf %11, %22 : vector<2x512xf32>
    %26 = tpu.concatenate %24, %25 in 1 : vector<2x512xf32>, vector<2x512xf32> -> vector<2x1024xf32>
    %27 = arith.truncf %26 : vector<2x1024xf32> to vector<2x1024xbf16>
    %c0_10 = arith.constant 0 : index
    %c0_11 = arith.constant 0 : index
    %28 = vector.load %arg3[%c0_10, %c0_11] : memref<1024x256xbf16, #tpu.memory_space<vmem>>, vector<1024x256xbf16>
    %cst_12 = arith.constant dense<0.000000e+00> : vector<2x256xf32>
    %29 = tpu.matmul %27, %28, %cst_12 {dimension_numbers = #tpu.dot_dimension_numbers<[1], [0], [0], [1], [0, 0, 1, 1], [], []>} : vector<2x1024xbf16>, vector<1024x256xbf16>, vector<2x256xf32> -> vector<2x256xf32>
    %c0_13 = arith.constant 0 : index
    %c0_14 = arith.constant 0 : index
    %30 = vector.load %arg4[%c0_13, %c0_14] : memref<2x256xf32, #tpu.memory_space<vmem>>, vector<1x256xf32>
    %31 = vector.broadcast %30 : vector<1x256xf32> to vector<2x256xf32>
    %32 = arith.addf %29, %31 : vector<2x256xf32>
    %33 = arith.negf %32 : vector<2x256xf32>
    %34 = math.exp %33 : vector<2x256xf32>
    %cst_15 = arith.constant 1.000000e+00 : f32
    %35 = vector.broadcast %cst_15 : f32 to vector<2x256xf32>
    %36 = arith.addf %35, %34 : vector<2x256xf32>
    %37 = arith.divf %35, %36 : vector<2x256xf32>
    %38 = arith.mulf %32, %37 : vector<2x256xf32>
    %c1 = arith.constant 1 : index
    %c0_16 = arith.constant 0 : index
    %39 = vector.load %arg4[%c1, %c0_16] : memref<2x256xf32, #tpu.memory_space<vmem>>, vector<1x256xf32>
    %40 = vector.broadcast %39 : vector<1x256xf32> to vector<2x256xf32>
    %41 = arith.mulf %38, %40 : vector<2x256xf32>
    %cst_17 = arith.constant dense<0.000000e+00> : vector<2xf32>
    %42 = vector.multi_reduction <add>, %41, %cst_17 [1] : vector<2x256xf32> to vector<2xf32>
    %43 = vector.shape_cast %42 : vector<2xf32> to vector<2x1xf32>
    %c0_18 = arith.constant 0 : index
    %44 = memref.load %arg5[%c0_18] : memref<1xf32, #tpu.memory_space<smem>>
    %45 = vector.broadcast %44 : f32 to vector<2x1xf32>
    %46 = arith.addf %43, %45 : vector<2x1xf32>
    %47 = vector.shape_cast %46 : vector<2x1xf32> to vector<2x1xf32>
    %48 = vector.broadcast %47 : vector<2x1xf32> to vector<2x128xf32>
    %c0_19 = arith.constant 0 : index
    %c0_20 = arith.constant 0 : index
    %49 = vector.load %arg6[%c0_19, %c0_20] : memref<2x128xf32, #tpu.memory_space<vmem>>, vector<2x128xf32>
    tpu.vector_store %arg6[%c0_19, %c0_20], %48 {strides = array<i32>} : memref<2x128xf32, #tpu.memory_space<vmem>>, vector<2x128xf32>,
    return
  }
}

</mosaic_0001>

<llo_original>
// kernel: tpu_custom_call.1
$region0: #{tpu_custom_call.1}
  #allocation0 [shape = 'u32[]', space=smem, size = 0x4, offset = 0x4, fixed_abs, tag = 'smem constant byte address 0x4 - core index']
  #allocation1 [shape = 'u32[144,128]{1,0:T(1,128)}', space=vmem, size = 0x12000, scoped, tag = 'internal scratch']
  #allocation2 [shape = 'f32[1]{0:T(128)S(6)}', space=smem, size = 0x200, scoped, tag = 'scoped memory for tpu_custom_call.1']
  %s0 = inlined_call_operand.hbm [shape: f32[2,1024], index: 0, kind: input, shape index: {}]
  %s1 = inlined_call_operand.hbm [shape: f32[2,1024], index: 1, kind: input, shape index: {}]
  %s2 = inlined_call_operand.hbm [shape: bf16[1024,512], index: 2, kind: input, shape index: {}]
  %s3 = inlined_call_operand.hbm [shape: bf16[1024,256], index: 3, kind: input, shape index: {}]
  %s4 = inlined_call_operand.vmem [shape: f32[2,256], index: 4, kind: input, shape index: {}]
  %s5 = inlined_call_operand.<no memory space> [shape: f32[1], index: 5, kind: input, shape index: {}]
  %s6 = inlined_call_operand.hbm [shape: f32[2,128], index: 6, kind: output, shape index: {}]
  %s7 = sld [smem:[#allocation0]]
  $region50: #{tpu_custom_call.1} parent=0
    _
  %s9 = ssub.s32 1, %s7
  %s10 = scalar_select 0, %s9, %s7
  %11 = sst [smem:[#allocation2]] %s5
  $region1: #{tpu_custom_call.1} parent=0
    #allocation3 [shape = 'u8[8192]{0}', space=vmem, size = 0x2000, scoped, tag = 'input window, operand 0, single buffered']
    #allocation4 [shape = 's32[1]{0}', space=sflag, size = 0x4, scoped, tag = 'scoped memory for tpu_custom_call.1']
    #allocation5 [shape = 's32[1]{0}', space=sflag, size = 0x4, scoped, tag = 'scoped memory for tpu_custom_call.1']
    #allocation6 [shape = 'u8[8192]{0}', space=vmem, size = 0x2000, scoped, tag = 'input window, operand 1, single buffered']
    #allocation7 [shape = 's32[1]{0}', space=sflag, size = 0x4, scoped, tag = 'scoped memory for tpu_custom_call.1']
    #allocation8 [shape = 'u8[1048576]{0}', space=vmem, size = 0x100000, scoped, tag = 'input window, operand 2, single buffered']
    #allocation9 [shape = 'u8[524288]{0}', space=vmem, size = 0x80000, scoped, tag = 'input window, operand 3, single buffered']
    #allocation10 [shape = 's32[1]{0}', space=sflag, size = 0x4, scoped, tag = 'scoped memory for tpu_custom_call.1']
    #allocation11 [shape = 'u8[1024]{0}', space=vmem, size = 0x400, scoped, tag = 'output window, operand 0, single buffered']
    %12 = vsyncpa [#allocation4], 0
    %13 = vsyncpa [#allocation7], 0
    %14 = vsyncpa [#allocation10], 0
    %15 = vsyncpa [#allocation5], 0
    // Predicated region
    $region2: #{tpu_custom_call.1} parent=1 // pred_check
      _
    $region3: #{tpu_custom_call.1} parent=1 // pred_check_branch
      %17 = sbr.rel (0) target = $region5
    $region4: #{tpu_custom_call.1} parent=1 // pred_region
      %s19 = ssub.s32 256, 256
      %20 = vsyncadd [#allocation4], %s19
      %s22 = sshll.u32 [#allocation3], 4
      %s23 = int_to_ptr.vmem [resolvable:$true] %s22
      %25 = dma.hbm_to_vmem [thread:$0]  %s0, 256, %s23, [#allocation4]
    $region5: #{tpu_custom_call.1} parent=1 // pred_fallthru
      _
    // Predicated region
    $region6: #{tpu_custom_call.1} parent=1 // pred_check
      _
    $region7: #{tpu_custom_call.1} parent=1 // pred_check_branch
      %27 = sbr.rel (0) target = $region9
    $region8: #{tpu_custom_call.1} parent=1 // pred_region
      %s29 = ssub.s32 256, 256
      %30 = vsyncadd [#allocation7], %s29
      %s32 = sshll.u32 [#allocation6], 4
      %s33 = int_to_ptr.vmem [resolvable:$true] %s32
      %35 = dma.hbm_to_vmem [thread:$0]  %s1, 256, %s33, [#allocation7]
    $region9: #{tpu_custom_call.1} parent=1 // pred_fallthru
      _
    // Predicated region
    $region10: #{tpu_custom_call.1} parent=1 // pred_check
      _
    $region11: #{tpu_custom_call.1} parent=1 // pred_check_branch
      %37 = sbr.rel (0) target = $region13
    $region12: #{tpu_custom_call.1} parent=1 // pred_region
      %s39 = ssub.s32 32768, 32768
      %40 = vsyncadd [#allocation7], %s39
      %s41 = sshll.u32 [#allocation8], 4
      %s42 = int_to_ptr.vmem [resolvable:$true] %s41
      %47 = dma.hbm_to_vmem [thread:$0]  %s2, 32768, %s42, [#allocation7], 256, 256, 16
    $region13: #{tpu_custom_call.1} parent=1 // pred_fallthru
      _
    // Predicated region
    $region14: #{tpu_custom_call.1} parent=1 // pred_check
      _
    $region15: #{tpu_custom_call.1} parent=1 // pred_check_branch
      %49 = sbr.rel (0) target = $region17
    $region16: #{tpu_custom_call.1} parent=1 // pred_region
      %s51 = ssub.s32 16384, 16384
      %52 = vsyncadd [#allocation10], %s51
      %s53 = sshll.u32 [#allocation9], 4
      %s54 = int_to_ptr.vmem [resolvable:$true] %s53
      %59 = dma.hbm_to_vmem [thread:$0]  %s3, 16384, %s54, [#allocation10], 128, 128, 8
    $region17: #{tpu_custom_call.1} parent=1 // pred_fallthru
      _
    // Predicated region
    $region18: #{tpu_custom_call.1} parent=1 // pred_check
      _
    $region19: #{tpu_custom_call.1} parent=1 // pred_check_branch
      %61 = sbr.rel (0) target = $region21
    $region20: #{tpu_custom_call.1} parent=1 // pred_region
      _
    $region21: #{tpu_custom_call.1} parent=1 // pred_fallthru
      _
    // Predicated region
    $region22: #{tpu_custom_call.1} parent=1 // pred_check
      _
    $region23: #{tpu_custom_call.1} parent=1 // pred_check_branch
      %63 = sbr.rel (0) target = $region25
    $region24: #{tpu_custom_call.1} parent=1 // pred_region
      _
    $region25: #{tpu_custom_call.1} parent=1 // pred_fallthru
      _
    // Predicated region
    $region26: #{tpu_custom_call.1} parent=1 // pred_check
      _
    $region27: #{tpu_custom_call.1} parent=1 // pred_check_branch
      %65 = sbr.rel (0) target = $region29
    $region28: #{tpu_custom_call.1} parent=1 // pred_region
      %66 = dma.done [#allocation4], 256
    $region29: #{tpu_custom_call.1} parent=1 // pred_fallthru
      _
    // Predicated region
    $region30: #{tpu_custom_call.1} parent=1 // pred_check
      _
    $region31: #{tpu_custom_call.1} parent=1 // pred_check_branch
      %68 = sbr.rel (0) target = $region33
    $region32: #{tpu_custom_call.1} parent=1 // pred_region
      %69 = dma.done [#allocation7], 256
    $region33: #{tpu_custom_call.1} parent=1 // pred_fallthru
      _
    // Predicated region
    $region34: #{tpu_custom_call.1} parent=1 // pred_check
      _
    $region35: #{tpu_custom_call.1} parent=1 // pred_check_branch
      %71 = sbr.rel (0) target = $region37
    $region36: #{tpu_custom_call.1} parent=1 // pred_region
      %72 = dma.done [#allocation7], 32768
    $region37: #{tpu_custom_call.1} parent=1 // pred_fallthru
      _
    // Predicated region
    $region38: #{tpu_custom_call.1} parent=1 // pred_check
      _
    $region39: #{tpu_custom_call.1} parent=1 // pred_check_branch
      %74 = sbr.rel (0) target = $region41
    $region40: #{tpu_custom_call.1} parent=1 // pred_region
      %75 = dma.done [#allocation10], 16384
    $region41: #{tpu_custom_call.1} parent=1 // pred_fallthru
      _
    %v76 = vld [vmem:[#allocation8] sm:$0xff]
    %v77 = vld [vmem:[#allocation8 + $0x8] sm:$0xff]
    %v78 = vld [vmem:[#allocation8 + $0x10] sm:$0xff]
    %v79 = vld [vmem:[#allocation8 + $0x18] sm:$0xff]
    %v80 = vld [vmem:[#allocation8 + $0x20] sm:$0xff]
    %v81 = vld [vmem:[#allocation8 + $0x28] sm:$0xff]
    %v82 = vld [vmem:[#allocation8 + $0x30] sm:$0xff]
    %v83 = vld [vmem:[#allocation8 + $0x38] sm:$0xff]
    %v84 = vld [vmem:[#allocation8 + $0x40] sm:$0xff]
    %v85 = vld [vmem:[#allocation8 + $0x48] sm:$0xff]
    %v86 = vld [vmem:[#allocation8 + $0x50] sm:$0xff]
    %v87 = vld [vmem:[#allocation8 + $0x58] sm:$0xff]
    %v88 = vld [vmem:[#allocation8 + $0x60] sm:$0xff]
    %v89 = vld [vmem:[#allocation8 + $0x68] sm:$0xff]
    %v90 = vld [vmem:[#allocation8 + $0x70] sm:$0xff]
    %v91 = vld [vmem:[#allocation8 + $0x78] sm:$0xff]
    %v92 = vld [vmem:[#allocation8 + $0x80] sm:$0xff]
    %v93 = vld [vmem:[#allocation8 + $0x88] sm:$0xff]
    %v94 = vld [vmem:[#allocation8 + $0x90] sm:$0xff]
    %v95 = vld [vmem:[#allocation8 + $0x98] sm:$0xff]
    %v96 = vld [vmem:[#allocation8 + $0xa0] sm:$0xff]
    %v97 = vld [vmem:[#allocation8 + $0xa8] sm:$0xff]
    %v98 = vld [vmem:[#allocation8 + $0xb0] sm:$0xff]
    %v99 = vld [vmem:[#allocation8 + $0xb8] sm:$0xff]
    %v100 = vld [vmem:[#allocation8 + $0xc0] sm:$0xff]
    %v101 = vld [vmem:[#allocation8 + $0xc8] sm:$0xff]
    %v102 = vld [vmem:[#allocation8 + $0xd0] sm:$0xff]
    %v103 = vld [vmem:[#allocation8 + $0xd8] sm:$0xff]
    %v104 = vld [vmem:[#allocation8 + $0xe0] sm:$0xff]
    %v105 = vld [vmem:[#allocation8 + $0xe8] sm:$0xff]
    %v106 = vld [vmem:[#allocation8 + $0xf0] sm:$0xff]
    %v107 = vld [vmem:[#allocation8 + $0xf8] sm:$0xff]
    %v108 = vld [vmem:[#allocation8 + $0x100] sm:$0xff]
    %v109 = vld [vmem:[#allocation8 + $0x108] sm:$0xff]
    %v110 = vld [vmem:[#allocation8 + $0x110] sm:$0xff]
    %v111 = vld [vmem:[#allocation8 + $0x118] sm:$0xff]
    %v112 = vld [vmem:[#allocation8 + $0x120] sm:$0xff]
    %v113 = vld [vmem:[#allocation8 + $0x128] sm:$0xff]
    %v114 = vld [vmem:[#allocation8 + $0x130] sm:$0xff]
    %v115 = vld [vmem:[#allocation8 + $0x138] sm:$0xff]
    %v116 = vld [vmem:[#allocation8 + $0x140] sm:$0xff]
    %v117 = vld [vmem:[#allocation8 + $0x148] sm:$0xff]
    %v118 = vld [vmem:[#allocation8 + $0x150] sm:$0xff]
    %v119 = vld [vmem:[#allocation8 + $0x158] sm:$0xff]
    %v120 = vld [vmem:[#allocation8 + $0x160] sm:$0xff]
    %v121 = vld [vmem:[#allocation8 + $0x168] sm:$0xff]
    %v122 = vld [vmem:[#allocation8 + $0x170] sm:$0xff]
    %v123 = vld [vmem:[#allocation8 + $0x178] sm:$0xff]
    %v124 = vld [vmem:[#allocation8 + $0x180] sm:$0xff]
    %v125 = vld [vmem:[#allocation8 + $0x188] sm:$0xff]
    %v126 = vld [vmem:[#allocation8 + $0x190] sm:$0xff]
    %v127 = vld [vmem:[#allocation8 + $0x198] sm:$0xff]
    %v128 = vld [vmem:[#allocation8 + $0x1a0] sm:$0xff]
    %v129 = vld [vmem:[#allocation8 + $0x1a8] sm:$0xff]
    %v130 = vld [vmem:[#allocation8 + $0x1b0] sm:$0xff]
    %v131 = vld [vmem:[#allocation8 + $0x1b8] sm:$0xff]
    %v132 = vld [vmem:[#allocation8 + $0x1c0] sm:$0xff]
    %v133 = vld [vmem:[#allocation8 + $0x1c8] sm:$0xff]
    %v134 = vld [vmem:[#allocation8 + $0x1d0] sm:$0xff]
    %v135 = vld [vmem:[#allocation8 + $0x1d8] sm:$0xff]
    %v136 = vld [vmem:[#allocation8 + $0x1e0] sm:$0xff]
    %v137 = vld [vmem:[#allocation8 + $0x1e8] sm:$0xff]
    %v138 = vld [vmem:[#allocation8 + $0x1f0] sm:$0xff]
    %v139 = vld [vmem:[#allocation8 + $0x1f8] sm:$0xff]
    %v140 = vld [vmem:[#allocation8 + $0x200] sm:$0xff]
    %v141 = vld [vmem:[#allocation8 + $0x208] sm:$0xff]
    %v142 = vld [vmem:[#allocation8 + $0x210] sm:$0xff]
    %v143 = vld [vmem:[#allocation8 + $0x218] sm:$0xff]
    %v144 = vld [vmem:[#allocation8 + $0x220] sm:$0xff]
    %v145 = vld [vmem:[#allocation8 + $0x228] sm:$0xff]
    %v146 = vld [vmem:[#allocation8 + $0x230] sm:$0xff]
    %v147 = vld [vmem:[#allocation8 + $0x238] sm:$0xff]
    %v148 = vld [vmem:[#allocation8 + $0x240] sm:$0xff]
    %v149 = vld [vmem:[#allocation8 + $0x248] sm:$0xff]
    %v150 = vld [vmem:[#allocation8 + $0x250] sm:$0xff]
    %v151 = vld [vmem:[#allocation8 + $0x258] sm:$0xff]
    %v152 = vld [vmem:[#allocation8 + $0x260] sm:$0xff]
    %v153 = vld [vmem:[#allocation8 + $0x268] sm:$0xff]
    %v154 = vld [vmem:[#allocation8 + $0x270] sm:$0xff]
    %v155 = vld [vmem:[#allocation8 + $0x278] sm:$0xff]
    %v156 = vld [vmem:[#allocation8 + $0x280] sm:$0xff]
    %v157 = vld [vmem:[#allocation8 + $0x288] sm:$0xff]
    %v158 = vld [vmem:[#allocation8 + $0x290] sm:$0xff]
    %v159 = vld [vmem:[#allocation8 + $0x298] sm:$0xff]
    %v160 = vld [vmem:[#allocation8 + $0x2a0] sm:$0xff]
    %v161 = vld [vmem:[#allocation8 + $0x2a8] sm:$0xff]
    %v162 = vld [vmem:[#allocation8 + $0x2b0] sm:$0xff]
    %v163 = vld [vmem:[#allocation8 + $0x2b8] sm:$0xff]
    %v164 = vld [vmem:[#allocation8 + $0x2c0] sm:$0xff]
    %v165 = vld [vmem:[#allocation8 + $0x2c8] sm:$0xff]
    %v166 = vld [vmem:[#allocation8 + $0x2d0] sm:$0xff]
    %v167 = vld [vmem:[#allocation8 + $0x2d8] sm:$0xff]
    %v168 = vld [vmem:[#allocation8 + $0x2e0] sm:$0xff]
    %v169 = vld [vmem:[#allocation8 + $0x2e8] sm:$0xff]
    %v170 = vld [vmem:[#allocation8 + $0x2f0] sm:$0xff]
    %v171 = vld [vmem:[#allocation8 + $0x2f8] sm:$0xff]
    %v172 = vld [vmem:[#allocation8 + $0x300] sm:$0xff]
    %v173 = vld [vmem:[#allocation8 + $0x308] sm:$0xff]
    %v174 = vld [vmem:[#allocation8 + $0x310] sm:$0xff]
    %v175 = vld [vmem:[#allocation8 + $0x318] sm:$0xff]
    %v176 = vld [vmem:[#allocation8 + $0x320] sm:$0xff]
    %v177 = vld [vmem:[#allocation8 + $0x328] sm:$0xff]
    %v178 = vld [vmem:[#allocation8 + $0x330] sm:$0xff]
    %v179 = vld [vmem:[#allocation8 + $0x338] sm:$0xff]
    %v180 = vld [vmem:[#allocation8 + $0x340] sm:$0xff]
    %v181 = vld [vmem:[#allocation8 + $0x348] sm:$0xff]
    %v182 = vld [vmem:[#allocation8 + $0x350] sm:$0xff]
    %v183 = vld [vmem:[#allocation8 + $0x358] sm:$0xff]
    %v184 = vld [vmem:[#allocation8 + $0x360] sm:$0xff]
    %v185 = vld [vmem:[#allocation8 + $0x368] sm:$0xff]
    %v186 = vld [vmem:[#allocation8 + $0x370] sm:$0xff]
    %v187 = vld [vmem:[#allocation8 + $0x378] sm:$0xff]
    %v188 = vld [vmem:[#allocation8 + $0x380] sm:$0xff]
    %v189 = vld [vmem:[#allocation8 + $0x388] sm:$0xff]
    %v190 = vld [vmem:[#allocation8 + $0x390] sm:$0xff]
    %v191 = vld [vmem:[#allocation8 + $0x398] sm:$0xff]
    %v192 = vld [vmem:[#allocation8 + $0x3a0] sm:$0xff]
    %v193 = vld [vmem:[#allocation8 + $0x3a8] sm:$0xff]
    %v194 = vld [vmem:[#allocation8 + $0x3b0] sm:$0xff]
    %v195 = vld [vmem:[#allocation8 + $0x3b8] sm:$0xff]
    %v196 = vld [vmem:[#allocation8 + $0x3c0] sm:$0xff]
    %v197 = vld [vmem:[#allocation8 + $0x3c8] sm:$0xff]
    %v198 = vld [vmem:[#allocation8 + $0x3d0] sm:$0xff]
    %v199 = vld [vmem:[#allocation8 + $0x3d8] sm:$0xff]
    %v200 = vld [vmem:[#allocation8 + $0x3e0] sm:$0xff]
    %v201 = vld [vmem:[#allocation8 + $0x3e8] sm:$0xff]
    %v202 = vld [vmem:[#allocation8 + $0x3f0] sm:$0xff]
    %v203 = vld [vmem:[#allocation8 + $0x3f8] sm:$0xff]
    %v204 = vld [vmem:[#allocation8 + $0x400] sm:$0xff]
    %v205 = vld [vmem:[#allocation8 + $0x408] sm:$0xff]
    %v206 = vld [vmem:[#allocation8 + $0x410] sm:$0xff]
    %v207 = vld [vmem:[#allocation8 + $0x418] sm:$0xff]
    %v208 = vld [vmem:[#allocation8 + $0x420] sm:$0xff]
    %v209 = vld [vmem:[#allocation8 + $0x428] sm:$0xff]
    %v210 = vld [vmem:[#allocation8 + $0x430] sm:$0xff]
    %v211 = vld [vmem:[#allocation8 + $0x438] sm:$0xff]
    %v212 = vld [vmem:[#allocation8 + $0x440] sm:$0xff]
    %v213 = vld [vmem:[#allocation8 + $0x448] sm:$0xff]
    %v214 = vld [vmem:[#allocation8 + $0x450] sm:$0xff]
    %v215 = vld [vmem:[#allocation8 + $0x458] sm:$0xff]
    %v216 = vld [vmem:[#allocation8 + $0x460] sm:$0xff]
    %v217 = vld [vmem:[#allocation8 + $0x468] sm:$0xff]
    %v218 = vld [vmem:[#allocation8 + $0x470] sm:$0xff]
    %v219 = vld [vmem:[#allocation8 + $0x478] sm:$0xff]
    %v220 = vld [vmem:[#allocation8 + $0x480] sm:$0xff]
    %v221 = vld [vmem:[#allocation8 + $0x488] sm:$0xff]
    %v222 = vld [vmem:[#allocation8 + $0x490] sm:$0xff]
    %v223 = vld [vmem:[#allocation8 + $0x498] sm:$0xff]
    %v224 = vld [vmem:[#allocation8 + $0x4a0] sm:$0xff]
    %v225 = vld [vmem:[#allocation8 + $0x4a8] sm:$0xff]
    %v226 = vld [vmem:[#allocation8 + $0x4b0] sm:$0xff]
    %v227 = vld [vmem:[#allocation8 + $0x4b8] sm:$0xff]
    %v228 = vld [vmem:[#allocation8 + $0x4c0] sm:$0xff]
    %v229 = vld [vmem:[#allocation8 + $0x4c8] sm:$0xff]
    %v230 = vld [vmem:[#allocation8 + $0x4d0] sm:$0xff]
    %v231 = vld [vmem:[#allocation8 + $0x4d8] sm:$0xff]
    %v232 = vld [vmem:[#allocation8 + $0x4e0] sm:$0xff]
    %v233 = vld [vmem:[#allocation8 + $0x4e8] sm:$0xff]
    %v234 = vld [vmem:[#allocation8 + $0x4f0] sm:$0xff]
    %v235 = vld [vmem:[#allocation8 + $0x4f8] sm:$0xff]
    %v236 = vld [vmem:[#allocation8 + $0x500] sm:$0xff]
    %v237 = vld [vmem:[#allocation8 + $0x508] sm:$0xff]
    %v238 = vld [vmem:[#allocation8 + $0x510] sm:$0xff]
    %v239 = vld [vmem:[#allocation8 + $0x518] sm:$0xff]
    %v240 = vld [vmem:[#allocation8 + $0x520] sm:$0xff]
    %v241 = vld [vmem:[#allocation8 + $0x528] sm:$0xff]
    %v242 = vld [vmem:[#allocation8 + $0x530] sm:$0xff]
    %v243 = vld [vmem:[#allocation8 + $0x538] sm:$0xff]
    %v244 = vld [vmem:[#allocation8 + $0x540] sm:$0xff]
    %v245 = vld [vmem:[#allocation8 + $0x548] sm:$0xff]
    %v246 = vld [vmem:[#allocation8 + $0x550] sm:$0xff]
    %v247 = vld [vmem:[#allocation8 + $0x558] sm:$0xff]
    %v248 = vld [vmem:[#allocation8 + $0x560] sm:$0xff]
    %v249 = vld [vmem:[#allocation8 + $0x568] sm:$0xff]
    %v250 = vld [vmem:[#allocation8 + $0x570] sm:$0xff]
    %v251 = vld [vmem:[#allocation8 + $0x578] sm:$0xff]
    %v252 = vld [vmem:[#allocation8 + $0x580] sm:$0xff]
    %v253 = vld [vmem:[#allocation8 + $0x588] sm:$0xff]
    %v254 = vld [vmem:[#allocation8 + $0x590] sm:$0xff]
    %v255 = vld [vmem:[#allocation8 + $0x598] sm:$0xff]
    %v256 = vld [vmem:[#allocation8 + $0x5a0] sm:$0xff]
    %v257 = vld [vmem:[#allocation8 + $0x5a8] sm:$0xff]
    %v258 = vld [vmem:[#allocation8 + $0x5b0] sm:$0xff]
    %v259 = vld [vmem:[#allocation8 + $0x5b8] sm:$0xff]
    %v260 = vld [vmem:[#allocation8 + $0x5c0] sm:$0xff]
    %v261 = vld [vmem:[#allocation8 + $0x5c8] sm:$0xff]
    %v262 = vld [vmem:[#allocation8 + $0x5d0] sm:$0xff]
    %v263 = vld [vmem:[#allocation8 + $0x5d8] sm:$0xff]
    %v264 = vld [vmem:[#allocation8 + $0x5e0] sm:$0xff]
    %v265 = vld [vmem:[#allocation8 + $0x5e8] sm:$0xff]
    %v266 = vld [vmem:[#allocation8 + $0x5f0] sm:$0xff]
    %v267 = vld [vmem:[#allocation8 + $0x5f8] sm:$0xff]
    %v268 = vld [vmem:[#allocation8 + $0x600] sm:$0xff]
    %v269 = vld [vmem:[#allocation8 + $0x608] sm:$0xff]
    %v270 = vld [vmem:[#allocation8 + $0x610] sm:$0xff]
    %v271 = vld [vmem:[#allocation8 + $0x618] sm:$0xff]
    %v272 = vld [vmem:[#allocation8 + $0x620] sm:$0xff]
    %v273 = vld [vmem:[#allocation8 + $0x628] sm:$0xff]
    %v274 = vld [vmem:[#allocation8 + $0x630] sm:$0xff]
    %v275 = vld [vmem:[#allocation8 + $0x638] sm:$0xff]
    %v276 = vld [vmem:[#allocation8 + $0x640] sm:$0xff]
    %v277 = vld [vmem:[#allocation8 + $0x648] sm:$0xff]
    %v278 = vld [vmem:[#allocation8 + $0x650] sm:$0xff]
    %v279 = vld [vmem:[#allocation8 + $0x658] sm:$0xff]
    %v280 = vld [vmem:[#allocation8 + $0x660] sm:$0xff]
    %v281 = vld [vmem:[#allocation8 + $0x668] sm:$0xff]
    %v282 = vld [vmem:[#allocation8 + $0x670] sm:$0xff]
    %v283 = vld [vmem:[#allocation8 + $0x678] sm:$0xff]
    %v284 = vld [vmem:[#allocation8 + $0x680] sm:$0xff]
    %v285 = vld [vmem:[#allocation8 + $0x688] sm:$0xff]
    %v286 = vld [vmem:[#allocation8 + $0x690] sm:$0xff]
    %v287 = vld [vmem:[#allocation8 + $0x698] sm:$0xff]
    %v288 = vld [vmem:[#allocation8 + $0x6a0] sm:$0xff]
    %v289 = vld [vmem:[#allocation8 + $0x6a8] sm:$0xff]
    %v290 = vld [vmem:[#allocation8 + $0x6b0] sm:$0xff]
    %v291 = vld [vmem:[#allocation8 + $0x6b8] sm:$0xff]
    %v292 = vld [vmem:[#allocation8 + $0x6c0] sm:$0xff]
    %v293 = vld [vmem:[#allocation8 + $0x6c8] sm:$0xff]
    %v294 = vld [vmem:[#allocation8 + $0x6d0] sm:$0xff]
    %v295 = vld [vmem:[#allocation8 + $0x6d8] sm:$0xff]
    %v296 = vld [vmem:[#allocation8 + $0x6e0] sm:$0xff]
    %v297 = vld [vmem:[#allocation8 + $0x6e8] sm:$0xff]
    %v298 = vld [vmem:[#allocation8 + $0x6f0] sm:$0xff]
    %v299 = vld [vmem:[#allocation8 + $0x6f8] sm:$0xff]
    %v300 = vld [vmem:[#allocation8 + $0x700] sm:$0xff]
    %v301 = vld [vmem:[#allocation8 + $0x708] sm:$0xff]
    %v302 = vld [vmem:[#allocation8 + $0x710] sm:$0xff]
    %v303 = vld [vmem:[#allocation8 + $0x718] sm:$0xff]
    %v304 = vld [vmem:[#allocation8 + $0x720] sm:$0xff]
    %v305 = vld [vmem:[#allocation8 + $0x728] sm:$0xff]
    %v306 = vld [vmem:[#allocation8 + $0x730] sm:$0xff]
    %v307 = vld [vmem:[#allocation8 + $0x738] sm:$0xff]
    %v308 = vld [vmem:[#allocation8 + $0x740] sm:$0xff]
    %v309 = vld [vmem:[#allocation8 + $0x748] sm:$0xff]
    %v310 = vld [vmem:[#allocation8 + $0x750] sm:$0xff]
    %v311 = vld [vmem:[#allocation8 + $0x758] sm:$0xff]
    %v312 = vld [vmem:[#allocation8 + $0x760] sm:$0xff]
    %v313 = vld [vmem:[#allocation8 + $0x768] sm:$0xff]
    %v314 = vld [vmem:[#allocation8 + $0x770] sm:$0xff]
    %v315 = vld [vmem:[#allocation8 + $0x778] sm:$0xff]
    %v316 = vld [vmem:[#allocation8 + $0x780] sm:$0xff]
    %v317 = vld [vmem:[#allocation8 + $0x788] sm:$0xff]
    %v318 = vld [vmem:[#allocation8 + $0x790] sm:$0xff]
    %v319 = vld [vmem:[#allocation8 + $0x798] sm:$0xff]
    %v320 = vld [vmem:[#allocation8 + $0x7a0] sm:$0xff]
    %v321 = vld [vmem:[#allocation8 + $0x7a8] sm:$0xff]
    %v322 = vld [vmem:[#allocation8 + $0x7b0] sm:$0xff]
    %v323 = vld [vmem:[#allocation8 + $0x7b8] sm:$0xff]
    %v324 = vld [vmem:[#allocation8 + $0x7c0] sm:$0xff]
    %v325 = vld [vmem:[#allocation8 + $0x7c8] sm:$0xff]
    %v326 = vld [vmem:[#allocation8 + $0x7d0] sm:$0xff]
    %v327 = vld [vmem:[#allocation8 + $0x7d8] sm:$0xff]
    %v328 = vld [vmem:[#allocation8 + $0x7e0] sm:$0xff]
    %v329 = vld [vmem:[#allocation8 + $0x7e8] sm:$0xff]
    %v330 = vld [vmem:[#allocation8 + $0x7f0] sm:$0xff]
    %v331 = vld [vmem:[#allocation8 + $0x7f8] sm:$0xff]
    %v332 = vld [vmem:[#allocation3] sm:$0xff]
    %v333 = vld [vmem:[#allocation3 + $0x8] sm:$0xff]
    %v336 = vcombine.high %v332, %v332
    %v338 = vunpack.c.l.s4 1983009808
    %v339 = vunpack.c.0.s8 %v338
    %v340 = vlaneseq
    %v341 = vshrl.u32 %v340, 7
    %v342 = vsub.s32 %v339, %v341
    %v343 = vrot.slane %v332, %v342
    %v345 = vunpack.c.l.s4 1983009808
    %v346 = vunpack.c.0.s8 %v345
    %v347 = vlaneseq
    %v348 = vshrl.u32 %v347, 7
    %v349 = vsub.s32 %v346, %v348
    %v350 = vrot.slane %v336, %v349
    %v351 = vcombine.high %v343, %v343
    %v352 = vcombine.high %v350, %v350
    %v353 = vcombine.high %v333, %v333
    %v355 = vunpack.c.l.s4 1983009808
    %v356 = vunpack.c.0.s8 %v355
    %v357 = vlaneseq
    %v358 = vshrl.u32 %v357, 7
    %v359 = vsub.s32 %v356, %v358
    %v360 = vrot.slane %v333, %v359
    %v362 = vunpack.c.l.s4 1983009808
    %v363 = vunpack.c.0.s8 %v362
    %v364 = vlaneseq
    %v365 = vshrl.u32 %v364, 7
    %v366 = vsub.s32 %v363, %v365
    %v367 = vrot.slane %v353, %v366
    %v368 = vcombine.high %v360, %v360
    %v369 = vcombine.high %v367, %v367
    %v378 = vpack.c.bf16 %v343, %v343
    %v379 = vpack.c.bf16 %v351, %v351
    %v380 = vpack.c.bf16 %v350, %v350
    %v381 = vpack.c.bf16 %v352, %v352
    %v382 = vpack.c.bf16 %v360, %v360
    %v383 = vpack.c.bf16 %v368, %v368
    %v384 = vpack.c.bf16 %v367, %v367
    %v385 = vpack.c.bf16 %v369, %v369
    %v642 = vunpack.c.l.b16 %v76
    %v643 = vunpack.c.h.b16 %v76
    %v644 = vunpack.c.l.b16 %v77
    %v645 = vunpack.c.h.b16 %v77
    %v646 = vunpack.c.l.b16 %v78
    %v647 = vunpack.c.h.b16 %v78
    %v648 = vunpack.c.l.b16 %v79
    %v649 = vunpack.c.h.b16 %v79
    %v650 = vunpack.c.l.b16 %v80
    %v651 = vunpack.c.h.b16 %v80
    %v652 = vunpack.c.l.b16 %v81
    %v653 = vunpack.c.h.b16 %v81
    %v654 = vunpack.c.l.b16 %v82
    %v655 = vunpack.c.h.b16 %v82
    %v656 = vunpack.c.l.b16 %v83
    %v657 = vunpack.c.h.b16 %v83
    %v658 = vunpack.c.l.b16 %v84
    %v659 = vunpack.c.h.b16 %v84
    %v660 = vunpack.c.l.b16 %v85
    %v661 = vunpack.c.h.b16 %v85
    %v662 = vunpack.c.l.b16 %v86
    %v663 = vunpack.c.h.b16 %v86
    %v664 = vunpack.c.l.b16 %v87
    %v665 = vunpack.c.h.b16 %v87
    %v666 = vunpack.c.l.b16 %v88
    %v667 = vunpack.c.h.b16 %v88
    %v668 = vunpack.c.l.b16 %v89
    %v669 = vunpack.c.h.b16 %v89
    %v670 = vunpack.c.l.b16 %v90
    %v671 = vunpack.c.h.b16 %v90
    %v672 = vunpack.c.l.b16 %v91
    %v673 = vunpack.c.h.b16 %v91
    %v674 = vunpack.c.l.b16 %v92
    %v675 = vunpack.c.h.b16 %v92
    %v676 = vunpack.c.l.b16 %v93
    %v677 = vunpack.c.h.b16 %v93
    %v678 = vunpack.c.l.b16 %v94
    %v679 = vunpack.c.h.b16 %v94
    %v680 = vunpack.c.l.b16 %v95
    %v681 = vunpack.c.h.b16 %v95
    %v682 = vunpack.c.l.b16 %v96
    %v683 = vunpack.c.h.b16 %v96
    %v684 = vunpack.c.l.b16 %v97
    %v685 = vunpack.c.h.b16 %v97
    %v686 = vunpack.c.l.b16 %v98
    %v687 = vunpack.c.h.b16 %v98
    %v688 = vunpack.c.l.b16 %v99
    %v689 = vunpack.c.h.b16 %v99
    %v690 = vunpack.c.l.b16 %v100
    %v691 = vunpack.c.h.b16 %v100
    %v692 = vunpack.c.l.b16 %v101
    %v693 = vunpack.c.h.b16 %v101
    %v694 = vunpack.c.l.b16 %v102
    %v695 = vunpack.c.h.b16 %v102
    %v696 = vunpack.c.l.b16 %v103
    %v697 = vunpack.c.h.b16 %v103
    %v698 = vunpack.c.l.b16 %v104
    %v699 = vunpack.c.h.b16 %v104
    %v700 = vunpack.c.l.b16 %v105
    %v701 = vunpack.c.h.b16 %v105
    %v702 = vunpack.c.l.b16 %v106
    %v703 = vunpack.c.h.b16 %v106
    %v704 = vunpack.c.l.b16 %v107
    %v705 = vunpack.c.h.b16 %v107
    %v706 = vunpack.c.l.b16 %v108
    %v707 = vunpack.c.h.b16 %v108
    %v708 = vunpack.c.l.b16 %v109
    %v709 = vunpack.c.h.b16 %v109
    %v710 = vunpack.c.l.b16 %v110
    %v711 = vunpack.c.h.b16 %v110
    %v712 = vunpack.c.l.b16 %v111
    %v713 = vunpack.c.h.b16 %v111
    %v714 = vunpack.c.l.b16 %v112
    %v715 = vunpack.c.h.b16 %v112
    %v716 = vunpack.c.l.b16 %v113
    %v717 = vunpack.c.h.b16 %v113
    %v718 = vunpack.c.l.b16 %v114
    %v719 = vunpack.c.h.b16 %v114
    %v720 = vunpack.c.l.b16 %v115
    %v721 = vunpack.c.h.b16 %v115
    %v722 = vunpack.c.l.b16 %v116
    %v723 = vunpack.c.h.b16 %v116
    %v724 = vunpack.c.l.b16 %v117
    %v725 = vunpack.c.h.b16 %v117
    %v726 = vunpack.c.l.b16 %v118
    %v727 = vunpack.c.h.b16 %v118
    %v728 = vunpack.c.l.b16 %v119
    %v729 = vunpack.c.h.b16 %v119
    %v730 = vunpack.c.l.b16 %v120
    %v731 = vunpack.c.h.b16 %v120
    %v732 = vunpack.c.l.b16 %v121
    %v733 = vunpack.c.h.b16 %v121
    %v734 = vunpack.c.l.b16 %v122
    %v735 = vunpack.c.h.b16 %v122
    %v736 = vunpack.c.l.b16 %v123
    %v737 = vunpack.c.h.b16 %v123
    %v738 = vunpack.c.l.b16 %v124
    %v739 = vunpack.c.h.b16 %v124
    %v740 = vunpack.c.l.b16 %v125
    %v741 = vunpack.c.h.b16 %v125
    %v742 = vunpack.c.l.b16 %v126
    %v743 = vunpack.c.h.b16 %v126
    %v744 = vunpack.c.l.b16 %v127
    %v745 = vunpack.c.h.b16 %v127
    %v746 = vunpack.c.l.b16 %v128
    %v747 = vunpack.c.h.b16 %v128
    %v748 = vunpack.c.l.b16 %v129
    %v749 = vunpack.c.h.b16 %v129
    %v750 = vunpack.c.l.b16 %v130
    %v751 = vunpack.c.h.b16 %v130
    %v752 = vunpack.c.l.b16 %v131
    %v753 = vunpack.c.h.b16 %v131
    %v754 = vunpack.c.l.b16 %v132
    %v755 = vunpack.c.h.b16 %v132
    %v756 = vunpack.c.l.b16 %v133
    %v757 = vunpack.c.h.b16 %v133
    %v758 = vunpack.c.l.b16 %v134
    %v759 = vunpack.c.h.b16 %v134
    %v760 = vunpack.c.l.b16 %v135
    %v761 = vunpack.c.h.b16 %v135
    %v762 = vunpack.c.l.b16 %v136
    %v763 = vunpack.c.h.b16 %v136
    %v764 = vunpack.c.l.b16 %v137
    %v765 = vunpack.c.h.b16 %v137
    %v766 = vunpack.c.l.b16 %v138
    %v767 = vunpack.c.h.b16 %v138
    %v768 = vunpack.c.l.b16 %v139
    %v769 = vunpack.c.h.b16 %v139
    %v770 = vunpack.c.l.b16 %v140
    %v771 = vunpack.c.h.b16 %v140
    %v772 = vunpack.c.l.b16 %v141
    %v773 = vunpack.c.h.b16 %v141
    %v774 = vunpack.c.l.b16 %v142
    %v775 = vunpack.c.h.b16 %v142
    %v776 = vunpack.c.l.b16 %v143
    %v777 = vunpack.c.h.b16 %v143
    %v778 = vunpack.c.l.b16 %v144
    %v779 = vunpack.c.h.b16 %v144
    %v780 = vunpack.c.l.b16 %v145
    %v781 = vunpack.c.h.b16 %v145
    %v782 = vunpack.c.l.b16 %v146
    %v783 = vunpack.c.h.b16 %v146
    %v784 = vunpack.c.l.b16 %v147
    %v785 = vunpack.c.h.b16 %v147
    %v786 = vunpack.c.l.b16 %v148
    %v787 = vunpack.c.h.b16 %v148
    %v788 = vunpack.c.l.b16 %v149
    %v789 = vunpack.c.h.b16 %v149
    %v790 = vunpack.c.l.b16 %v150
    %v791 = vunpack.c.h.b16 %v150
    %v792 = vunpack.c.l.b16 %v151
    %v793 = vunpack.c.h.b16 %v151
    %v794 = vunpack.c.l.b16 %v152
    %v795 = vunpack.c.h.b16 %v152
    %v796 = vunpack.c.l.b16 %v153
    %v797 = vunpack.c.h.b16 %v153
    %v798 = vunpack.c.l.b16 %v154
    %v799 = vunpack.c.h.b16 %v154
    %v800 = vunpack.c.l.b16 %v155
    %v801 = vunpack.c.h.b16 %v155
    %v802 = vunpack.c.l.b16 %v156
    %v803 = vunpack.c.h.b16 %v156
    %v804 = vunpack.c.l.b16 %v157
    %v805 = vunpack.c.h.b16 %v157
    %v806 = vunpack.c.l.b16 %v158
    %v807 = vunpack.c.h.b16 %v158
    %v808 = vunpack.c.l.b16 %v159
    %v809 = vunpack.c.h.b16 %v159
    %v810 = vunpack.c.l.b16 %v160
    %v811 = vunpack.c.h.b16 %v160
    %v812 = vunpack.c.l.b16 %v161
    %v813 = vunpack.c.h.b16 %v161
    %v814 = vunpack.c.l.b16 %v162
    %v815 = vunpack.c.h.b16 %v162
    %v816 = vunpack.c.l.b16 %v163
    %v817 = vunpack.c.h.b16 %v163
    %v818 = vunpack.c.l.b16 %v164
    %v819 = vunpack.c.h.b16 %v164
    %v820 = vunpack.c.l.b16 %v165
    %v821 = vunpack.c.h.b16 %v165
    %v822 = vunpack.c.l.b16 %v166
    %v823 = vunpack.c.h.b16 %v166
    %v824 = vunpack.c.l.b16 %v167
    %v825 = vunpack.c.h.b16 %v167
    %v826 = vunpack.c.l.b16 %v168
    %v827 = vunpack.c.h.b16 %v168
    %v828 = vunpack.c.l.b16 %v169
    %v829 = vunpack.c.h.b16 %v169
    %v830 = vunpack.c.l.b16 %v170
    %v831 = vunpack.c.h.b16 %v170
    %v832 = vunpack.c.l.b16 %v171
    %v833 = vunpack.c.h.b16 %v171
    %v834 = vunpack.c.l.b16 %v172
    %v835 = vunpack.c.h.b16 %v172
    %v836 = vunpack.c.l.b16 %v173
    %v837 = vunpack.c.h.b16 %v173
    %v838 = vunpack.c.l.b16 %v174
    %v839 = vunpack.c.h.b16 %v174
    %v840 = vunpack.c.l.b16 %v175
    %v841 = vunpack.c.h.b16 %v175
    %v842 = vunpack.c.l.b16 %v176
    %v843 = vunpack.c.h.b16 %v176
    %v844 = vunpack.c.l.b16 %v177
    %v845 = vunpack.c.h.b16 %v177
    %v846 = vunpack.c.l.b16 %v178
    %v847 = vunpack.c.h.b16 %v178
    %v848 = vunpack.c.l.b16 %v179
    %v849 = vunpack.c.h.b16 %v179
    %v850 = vunpack.c.l.b16 %v180
    %v851 = vunpack.c.h.b16 %v180
    %v852 = vunpack.c.l.b16 %v181
    %v853 = vunpack.c.h.b16 %v181
    %v854 = vunpack.c.l.b16 %v182
    %v855 = vunpack.c.h.b16 %v182
    %v856 = vunpack.c.l.b16 %v183
    %v857 = vunpack.c.h.b16 %v183
    %v858 = vunpack.c.l.b16 %v184
    %v859 = vunpack.c.h.b16 %v184
    %v860 = vunpack.c.l.b16 %v185
    %v861 = vunpack.c.h.b16 %v185
    %v862 = vunpack.c.l.b16 %v186
    %v863 = vunpack.c.h.b16 %v186
    %v864 = vunpack.c.l.b16 %v187
    %v865 = vunpack.c.h.b16 %v187
    %v866 = vunpack.c.l.b16 %v188
    %v867 = vunpack.c.h.b16 %v188
    %v868 = vunpack.c.l.b16 %v189
    %v869 = vunpack.c.h.b16 %v189
    %v870 = vunpack.c.l.b16 %v190
    %v871 = vunpack.c.h.b16 %v190
    %v872 = vunpack.c.l.b16 %v191
    %v873 = vunpack.c.h.b16 %v191
    %v874 = vunpack.c.l.b16 %v192
    %v875 = vunpack.c.h.b16 %v192
    %v876 = vunpack.c.l.b16 %v193
    %v877 = vunpack.c.h.b16 %v193
    %v878 = vunpack.c.l.b16 %v194
    %v879 = vunpack.c.h.b16 %v194
    %v880 = vunpack.c.l.b16 %v195
    %v881 = vunpack.c.h.b16 %v195
    %v882 = vunpack.c.l.b16 %v196
    %v883 = vunpack.c.h.b16 %v196
    %v884 = vunpack.c.l.b16 %v197
    %v885 = vunpack.c.h.b16 %v197
    %v886 = vunpack.c.l.b16 %v198
    %v887 = vunpack.c.h.b16 %v198
    %v888 = vunpack.c.l.b16 %v199
    %v889 = vunpack.c.h.b16 %v199
    %v890 = vunpack.c.l.b16 %v200
    %v891 = vunpack.c.h.b16 %v200
    %v892 = vunpack.c.l.b16 %v201
    %v893 = vunpack.c.h.b16 %v201
    %v894 = vunpack.c.l.b16 %v202
    %v895 = vunpack.c.h.b16 %v202
    %v896 = vunpack.c.l.b16 %v203
    %v897 = vunpack.c.h.b16 %v203
    %v898 = vunpack.c.l.b16 %v204
    %v899 = vunpack.c.h.b16 %v204
    %v900 = vunpack.c.l.b16 %v205
    %v901 = vunpack.c.h.b16 %v205
    %v902 = vunpack.c.l.b16 %v206
    %v903 = vunpack.c.h.b16 %v206
    %v904 = vunpack.c.l.b16 %v207
    %v905 = vunpack.c.h.b16 %v207
    %v906 = vunpack.c.l.b16 %v208
    %v907 = vunpack.c.h.b16 %v208
    %v908 = vunpack.c.l.b16 %v209
    %v909 = vunpack.c.h.b16 %v209
    %v910 = vunpack.c.l.b16 %v210
    %v911 = vunpack.c.h.b16 %v210
    %v912 = vunpack.c.l.b16 %v211
    %v913 = vunpack.c.h.b16 %v211
    %v914 = vunpack.c.l.b16 %v212
    %v915 = vunpack.c.h.b16 %v212
    %v916 = vunpack.c.l.b16 %v213
    %v917 = vunpack.c.h.b16 %v213
    %v918 = vunpack.c.l.b16 %v214
    %v919 = vunpack.c.h.b16 %v214
    %v920 = vunpack.c.l.b16 %v215
    %v921 = vunpack.c.h.b16 %v215
    %v922 = vunpack.c.l.b16 %v216
    %v923 = vunpack.c.h.b16 %v216
    %v924 = vunpack.c.l.b16 %v217
    %v925 = vunpack.c.h.b16 %v217
    %v926 = vunpack.c.l.b16 %v218
    %v927 = vunpack.c.h.b16 %v218
    %v928 = vunpack.c.l.b16 %v219
    %v929 = vunpack.c.h.b16 %v219
    %v930 = vunpack.c.l.b16 %v220
    %v931 = vunpack.c.h.b16 %v220
    %v932 = vunpack.c.l.b16 %v221
    %v933 = vunpack.c.h.b16 %v221
    %v934 = vunpack.c.l.b16 %v222
    %v935 = vunpack.c.h.b16 %v222
    %v936 = vunpack.c.l.b16 %v223
    %v937 = vunpack.c.h.b16 %v223
    %v938 = vunpack.c.l.b16 %v224
    %v939 = vunpack.c.h.b16 %v224
    %v940 = vunpack.c.l.b16 %v225
    %v941 = vunpack.c.h.b16 %v225
    %v942 = vunpack.c.l.b16 %v226
    %v943 = vunpack.c.h.b16 %v226
    %v944 = vunpack.c.l.b16 %v227
    %v945 = vunpack.c.h.b16 %v227
    %v946 = vunpack.c.l.b16 %v228
    %v947 = vunpack.c.h.b16 %v228
    %v948 = vunpack.c.l.b16 %v229
    %v949 = vunpack.c.h.b16 %v229
    %v950 = vunpack.c.l.b16 %v230
    %v951 = vunpack.c.h.b16 %v230
    %v952 = vunpack.c.l.b16 %v231
    %v953 = vunpack.c.h.b16 %v231
    %v954 = vunpack.c.l.b16 %v232
    %v955 = vunpack.c.h.b16 %v232
    %v956 = vunpack.c.l.b16 %v233
    %v957 = vunpack.c.h.b16 %v233
    %v958 = vunpack.c.l.b16 %v234
    %v959 = vunpack.c.h.b16 %v234
    %v960 = vunpack.c.l.b16 %v235
    %v961 = vunpack.c.h.b16 %v235
    %v962 = vunpack.c.l.b16 %v236
    %v963 = vunpack.c.h.b16 %v236
    %v964 = vunpack.c.l.b16 %v237
    %v965 = vunpack.c.h.b16 %v237
    %v966 = vunpack.c.l.b16 %v238
    %v967 = vunpack.c.h.b16 %v238
    %v968 = vunpack.c.l.b16 %v239
    %v969 = vunpack.c.h.b16 %v239
    %v970 = vunpack.c.l.b16 %v240
    %v971 = vunpack.c.h.b16 %v240
    %v972 = vunpack.c.l.b16 %v241
    %v973 = vunpack.c.h.b16 %v241
    %v974 = vunpack.c.l.b16 %v242
    %v975 = vunpack.c.h.b16 %v242
    %v976 = vunpack.c.l.b16 %v243
    %v977 = vunpack.c.h.b16 %v243
    %v978 = vunpack.c.l.b16 %v244
    %v979 = vunpack.c.h.b16 %v244
    %v980 = vunpack.c.l.b16 %v245
    %v981 = vunpack.c.h.b16 %v245
    %v982 = vunpack.c.l.b16 %v246
    %v983 = vunpack.c.h.b16 %v246
    %v984 = vunpack.c.l.b16 %v247
    %v985 = vunpack.c.h.b16 %v247
    %v986 = vunpack.c.l.b16 %v248
    %v987 = vunpack.c.h.b16 %v248
    %v988 = vunpack.c.l.b16 %v249
    %v989 = vunpack.c.h.b16 %v249
    %v990 = vunpack.c.l.b16 %v250
    %v991 = vunpack.c.h.b16 %v250
    %v992 = vunpack.c.l.b16 %v251
    %v993 = vunpack.c.h.b16 %v251
    %v994 = vunpack.c.l.b16 %v252
    %v995 = vunpack.c.h.b16 %v252
    %v996 = vunpack.c.l.b16 %v253
    %v997 = vunpack.c.h.b16 %v253
    %v998 = vunpack.c.l.b16 %v254
    %v999 = vunpack.c.h.b16 %v254
    %v1000 = vunpack.c.l.b16 %v255
    %v1001 = vunpack.c.h.b16 %v255
    %v1002 = vunpack.c.l.b16 %v256
    %v1003 = vunpack.c.h.b16 %v256
    %v1004 = vunpack.c.l.b16 %v257
    %v1005 = vunpack.c.h.b16 %v257
    %v1006 = vunpack.c.l.b16 %v258
    %v1007 = vunpack.c.h.b16 %v258
    %v1008 = vunpack.c.l.b16 %v259
    %v1009 = vunpack.c.h.b16 %v259
    %v1010 = vunpack.c.l.b16 %v260
    %v1011 = vunpack.c.h.b16 %v260
    %v1012 = vunpack.c.l.b16 %v261
    %v1013 = vunpack.c.h.b16 %v261
    %v1014 = vunpack.c.l.b16 %v262
    %v1015 = vunpack.c.h.b16 %v262
    %v1016 = vunpack.c.l.b16 %v263
    %v1017 = vunpack.c.h.b16 %v263
    %v1018 = vunpack.c.l.b16 %v264
    %v1019 = vunpack.c.h.b16 %v264
    %v1020 = vunpack.c.l.b16 %v265
    %v1021 = vunpack.c.h.b16 %v265
    %v1022 = vunpack.c.l.b16 %v266
    %v1023 = vunpack.c.h.b16 %v266
    %v1024 = vunpack.c.l.b16 %v267
    %v1025 = vunpack.c.h.b16 %v267
    %v1026 = vunpack.c.l.b16 %v268
    %v1027 = vunpack.c.h.b16 %v268
    %v1028 = vunpack.c.l.b16 %v269
    %v1029 = vunpack.c.h.b16 %v269
    %v1030 = vunpack.c.l.b16 %v270
    %v1031 = vunpack.c.h.b16 %v270
    %v1032 = vunpack.c.l.b16 %v271
    %v1033 = vunpack.c.h.b16 %v271
    %v1034 = vunpack.c.l.b16 %v272
    %v1035 = vunpack.c.h.b16 %v272
    %v1036 = vunpack.c.l.b16 %v273
    %v1037 = vunpack.c.h.b16 %v273
    %v1038 = vunpack.c.l.b16 %v274
    %v1039 = vunpack.c.h.b16 %v274
    %v1040 = vunpack.c.l.b16 %v275
    %v1041 = vunpack.c.h.b16 %v275
    %v1042 = vunpack.c.l.b16 %v276
    %v1043 = vunpack.c.h.b16 %v276
    %v1044 = vunpack.c.l.b16 %v277
    %v1045 = vunpack.c.h.b16 %v277
    %v1046 = vunpack.c.l.b16 %v278
    %v1047 = vunpack.c.h.b16 %v278
    %v1048 = vunpack.c.l.b16 %v279
    %v1049 = vunpack.c.h.b16 %v279
    %v1050 = vunpack.c.l.b16 %v280
    %v1051 = vunpack.c.h.b16 %v280
    %v1052 = vunpack.c.l.b16 %v281
    %v1053 = vunpack.c.h.b16 %v281
    %v1054 = vunpack.c.l.b16 %v282
    %v1055 = vunpack.c.h.b16 %v282
    %v1056 = vunpack.c.l.b16 %v283
    %v1057 = vunpack.c.h.b16 %v283
    %v1058 = vunpack.c.l.b16 %v284
    %v1059 = vunpack.c.h.b16 %v284
    %v1060 = vunpack.c.l.b16 %v285
    %v1061 = vunpack.c.h.b16 %v285
    %v1062 = vunpack.c.l.b16 %v286
    %v1063 = vunpack.c.h.b16 %v286
    %v1064 = vunpack.c.l.b16 %v287
    %v1065 = vunpack.c.h.b16 %v287
    %v1066 = vunpack.c.l.b16 %v288
    %v1067 = vunpack.c.h.b16 %v288
    %v1068 = vunpack.c.l.b16 %v289
    %v1069 = vunpack.c.h.b16 %v289
    %v1070 = vunpack.c.l.b16 %v290
    %v1071 = vunpack.c.h.b16 %v290
    %v1072 = vunpack.c.l.b16 %v291
    %v1073 = vunpack.c.h.b16 %v291
    %v1074 = vunpack.c.l.b16 %v292
    %v1075 = vunpack.c.h.b16 %v292
    %v1076 = vunpack.c.l.b16 %v293
    %v1077 = vunpack.c.h.b16 %v293
    %v1078 = vunpack.c.l.b16 %v294
    %v1079 = vunpack.c.h.b16 %v294
    %v1080 = vunpack.c.l.b16 %v295
    %v1081 = vunpack.c.h.b16 %v295
    %v1082 = vunpack.c.l.b16 %v296
    %v1083 = vunpack.c.h.b16 %v296
    %v1084 = vunpack.c.l.b16 %v297
    %v1085 = vunpack.c.h.b16 %v297
    %v1086 = vunpack.c.l.b16 %v298
    %v1087 = vunpack.c.h.b16 %v298
    %v1088 = vunpack.c.l.b16 %v299
    %v1089 = vunpack.c.h.b16 %v299
    %v1090 = vunpack.c.l.b16 %v300
    %v1091 = vunpack.c.h.b16 %v300
    %v1092 = vunpack.c.l.b16 %v301
    %v1093 = vunpack.c.h.b16 %v301
    %v1094 = vunpack.c.l.b16 %v302
    %v1095 = vunpack.c.h.b16 %v302
    %v1096 = vunpack.c.l.b16 %v303
    %v1097 = vunpack.c.h.b16 %v303
    %v1098 = vunpack.c.l.b16 %v304
    %v1099 = vunpack.c.h.b16 %v304
    %v1100 = vunpack.c.l.b16 %v305
    %v1101 = vunpack.c.h.b16 %v305
    %v1102 = vunpack.c.l.b16 %v306
    %v1103 = vunpack.c.h.b16 %v306
    %v1104 = vunpack.c.l.b16 %v307
    %v1105 = vunpack.c.h.b16 %v307
    %v1106 = vunpack.c.l.b16 %v308
    %v1107 = vunpack.c.h.b16 %v308
    %v1108 = vunpack.c.l.b16 %v309
    %v1109 = vunpack.c.h.b16 %v309
    %v1110 = vunpack.c.l.b16 %v310
    %v1111 = vunpack.c.h.b16 %v310
    %v1112 = vunpack.c.l.b16 %v311
    %v1113 = vunpack.c.h.b16 %v311
    %v1114 = vunpack.c.l.b16 %v312
    %v1115 = vunpack.c.h.b16 %v312
    %v1116 = vunpack.c.l.b16 %v313
    %v1117 = vunpack.c.h.b16 %v313
    %v1118 = vunpack.c.l.b16 %v314
    %v1119 = vunpack.c.h.b16 %v314
    %v1120 = vunpack.c.l.b16 %v315
    %v1121 = vunpack.c.h.b16 %v315
    %v1122 = vunpack.c.l.b16 %v316
    %v1123 = vunpack.c.h.b16 %v316
    %v1124 = vunpack.c.l.b16 %v317
    %v1125 = vunpack.c.h.b16 %v317
    %v1126 = vunpack.c.l.b16 %v318
    %v1127 = vunpack.c.h.b16 %v318
    %v1128 = vunpack.c.l.b16 %v319
    %v1129 = vunpack.c.h.b16 %v319
    %v1130 = vunpack.c.l.b16 %v320
    %v1131 = vunpack.c.h.b16 %v320
    %v1132 = vunpack.c.l.b16 %v321
    %v1133 = vunpack.c.h.b16 %v321
    %v1134 = vunpack.c.l.b16 %v322
    %v1135 = vunpack.c.h.b16 %v322
    %v1136 = vunpack.c.l.b16 %v323
    %v1137 = vunpack.c.h.b16 %v323
    %v1138 = vunpack.c.l.b16 %v324
    %v1139 = vunpack.c.h.b16 %v324
    %v1140 = vunpack.c.l.b16 %v325
    %v1141 = vunpack.c.h.b16 %v325
    %v1142 = vunpack.c.l.b16 %v326
    %v1143 = vunpack.c.h.b16 %v326
    %v1144 = vunpack.c.l.b16 %v327
    %v1145 = vunpack.c.h.b16 %v327
    %v1146 = vunpack.c.l.b16 %v328
    %v1147 = vunpack.c.h.b16 %v328
    %v1148 = vunpack.c.l.b16 %v329
    %v1149 = vunpack.c.h.b16 %v329
    %v1150 = vunpack.c.l.b16 %v330
    %v1151 = vunpack.c.h.b16 %v330
    %v1152 = vunpack.c.l.b16 %v331
    %v1153 = vunpack.c.h.b16 %v331
    %v1154 = vpack.c.b16 %v646, %v642
    %v1155 = vpack.c.b16 %v647, %v643
    %v1156 = vpack.c.b16 %v648, %v644
    %v1157 = vpack.c.b16 %v649, %v645
    %v1158 = vpack.c.b16 %v654, %v650
    %v1159 = vpack.c.b16 %v655, %v651
    %v1160 = vpack.c.b16 %v656, %v652
    %v1161 = vpack.c.b16 %v657, %v653
    %v1162 = vpack.c.b16 %v662, %v658
    %v1163 = vpack.c.b16 %v663, %v659
    %v1164 = vpack.c.b16 %v664, %v660
    %v1165 = vpack.c.b16 %v665, %v661
    %v1166 = vpack.c.b16 %v670, %v666
    %v1167 = vpack.c.b16 %v671, %v667
    %v1168 = vpack.c.b16 %v672, %v668
    %v1169 = vpack.c.b16 %v673, %v669
    %v1170 = vpack.c.b16 %v678, %v674
    %v1171 = vpack.c.b16 %v679, %v675
    %v1172 = vpack.c.b16 %v680, %v676
    %v1173 = vpack.c.b16 %v681, %v677
    %v1174 = vpack.c.b16 %v686, %v682
    %v1175 = vpack.c.b16 %v687, %v683
    %v1176 = vpack.c.b16 %v688, %v684
    %v1177 = vpack.c.b16 %v689, %v685
    %v1178 = vpack.c.b16 %v694, %v690
    %v1179 = vpack.c.b16 %v695, %v691
    %v1180 = vpack.c.b16 %v696, %v692
    %v1181 = vpack.c.b16 %v697, %v693
    %v1182 = vpack.c.b16 %v702, %v698
    %v1183 = vpack.c.b16 %v703, %v699
    %v1184 = vpack.c.b16 %v704, %v700
    %v1185 = vpack.c.b16 %v705, %v701
    %v1186 = vpack.c.b16 %v710, %v706
    %v1187 = vpack.c.b16 %v711, %v707
    %v1188 = vpack.c.b16 %v712, %v708
    %v1189 = vpack.c.b16 %v713, %v709
    %v1190 = vpack.c.b16 %v718, %v714
    %v1191 = vpack.c.b16 %v719, %v715
    %v1192 = vpack.c.b16 %v720, %v716
    %v1193 = vpack.c.b16 %v721, %v717
    %v1194 = vpack.c.b16 %v726, %v722
    %v1195 = vpack.c.b16 %v727, %v723
    %v1196 = vpack.c.b16 %v728, %v724
    %v1197 = vpack.c.b16 %v729, %v725
    %v1198 = vpack.c.b16 %v734, %v730
    %v1199 = vpack.c.b16 %v735, %v731
    %v1200 = vpack.c.b16 %v736, %v732
    %v1201 = vpack.c.b16 %v737, %v733
    %v1202 = vpack.c.b16 %v742, %v738
    %v1203 = vpack.c.b16 %v743, %v739
    %v1204 = vpack.c.b16 %v744, %v740
    %v1205 = vpack.c.b16 %v745, %v741
    %v1206 = vpack.c.b16 %v750, %v746
    %v1207 = vpack.c.b16 %v751, %v747
    %v1208 = vpack.c.b16 %v752, %v748
    %v1209 = vpack.c.b16 %v753, %v749
    %v1210 = vpack.c.b16 %v758, %v754
    %v1211 = vpack.c.b16 %v759, %v755
    %v1212 = vpack.c.b16 %v760, %v756
    %v1213 = vpack.c.b16 %v761, %v757
    %v1214 = vpack.c.b16 %v766, %v762
    %v1215 = vpack.c.b16 %v767, %v763
    %v1216 = vpack.c.b16 %v768, %v764
    %v1217 = vpack.c.b16 %v769, %v765
    %v1218 = vpack.c.b16 %v774, %v770
    %v1219 = vpack.c.b16 %v775, %v771
    %v1220 = vpack.c.b16 %v776, %v772
    %v1221 = vpack.c.b16 %v777, %v773
    %v1222 = vpack.c.b16 %v782, %v778
    %v1223 = vpack.c.b16 %v783, %v779
    %v1224 = vpack.c.b16 %v784, %v780
    %v1225 = vpack.c.b16 %v785, %v781
    %v1226 = vpack.c.b16 %v790, %v786
    %v1227 = vpack.c.b16 %v791, %v787
    %v1228 = vpack.c.b16 %v792, %v788
    %v1229 = vpack.c.b16 %v793, %v789
    %v1230 = vpack.c.b16 %v798, %v794
    %v1231 = vpack.c.b16 %v799, %v795
    %v1232 = vpack.c.b16 %v800, %v796
    %v1233 = vpack.c.b16 %v801, %v797
    %v1234 = vpack.c.b16 %v806, %v802
    %v1235 = vpack.c.b16 %v807, %v803
    %v1236 = vpack.c.b16 %v808, %v804
    %v1237 = vpack.c.b16 %v809, %v805
    %v1238 = vpack.c.b16 %v814, %v810
    %v1239 = vpack.c.b16 %v815, %v811
    %v1240 = vpack.c.b16 %v816, %v812
    %v1241 = vpack.c.b16 %v817, %v813
    %v1242 = vpack.c.b16 %v822, %v818
    %v1243 = vpack.c.b16 %v823, %v819
    %v1244 = vpack.c.b16 %v824, %v820
    %v1245 = vpack.c.b16 %v825, %v821
    %v1246 = vpack.c.b16 %v830, %v826
    %v1247 = vpack.c.b16 %v831, %v827
    %v1248 = vpack.c.b16 %v832, %v828
    %v1249 = vpack.c.b16 %v833, %v829
    %v1250 = vpack.c.b16 %v838, %v834
    %v1251 = vpack.c.b16 %v839, %v835
    %v1252 = vpack.c.b16 %v840, %v836
    %v1253 = vpack.c.b16 %v841, %v837
    %v1254 = vpack.c.b16 %v846, %v842
    %v1255 = vpack.c.b16 %v847, %v843
    %v1256 = vpack.c.b16 %v848, %v844
    %v1257 = vpack.c.b16 %v849, %v845
    %v1258 = vpack.c.b16 %v854, %v850
    %v1259 = vpack.c.b16 %v855, %v851
    %v1260 = vpack.c.b16 %v856, %v852
    %v1261 = vpack.c.b16 %v857, %v853
    %v1262 = vpack.c.b16 %v862, %v858
    %v1263 = vpack.c.b16 %v863, %v859
    %v1264 = vpack.c.b16 %v864, %v860
    %v1265 = vpack.c.b16 %v865, %v861
    %v1266 = vpack.c.b16 %v870, %v866
    %v1267 = vpack.c.b16 %v871, %v867
    %v1268 = vpack.c.b16 %v872, %v868
    %v1269 = vpack.c.b16 %v873, %v869
    %v1270 = vpack.c.b16 %v878, %v874
    %v1271 = vpack.c.b16 %v879, %v875
    %v1272 = vpack.c.b16 %v880, %v876
    %v1273 = vpack.c.b16 %v881, %v877
    %v1274 = vpack.c.b16 %v886, %v882
    %v1275 = vpack.c.b16 %v887, %v883
    %v1276 = vpack.c.b16 %v888, %v884
    %v1277 = vpack.c.b16 %v889, %v885
    %v1278 = vpack.c.b16 %v894, %v890
    %v1279 = vpack.c.b16 %v895, %v891
    %v1280 = vpack.c.b16 %v896, %v892
    %v1281 = vpack.c.b16 %v897, %v893
    %v1282 = vpack.c.b16 %v902, %v898
    %v1283 = vpack.c.b16 %v903, %v899
    %v1284 = vpack.c.b16 %v904, %v900
    %v1285 = vpack.c.b16 %v905, %v901
    %v1286 = vpack.c.b16 %v910, %v906
    %v1287 = vpack.c.b16 %v911, %v907
    %v1288 = vpack.c.b16 %v912, %v908
    %v1289 = vpack.c.b16 %v913, %v909
    %v1290 = vpack.c.b16 %v918, %v914
    %v1291 = vpack.c.b16 %v919, %v915
    %v1292 = vpack.c.b16 %v920, %v916
    %v1293 = vpack.c.b16 %v921, %v917
    %v1294 = vpack.c.b16 %v926, %v922
    %v1295 = vpack.c.b16 %v927, %v923
    %v1296 = vpack.c.b16 %v928, %v924
    %v1297 = vpack.c.b16 %v929, %v925
    %v1298 = vpack.c.b16 %v934, %v930
    %v1299 = vpack.c.b16 %v935, %v931
    %v1300 = vpack.c.b16 %v936, %v932
    %v1301 = vpack.c.b16 %v937, %v933
    %v1302 = vpack.c.b16 %v942, %v938
    %v1303 = vpack.c.b16 %v943, %v939
    %v1304 = vpack.c.b16 %v944, %v940
    %v1305 = vpack.c.b16 %v945, %v941
    %v1306 = vpack.c.b16 %v950, %v946
    %v1307 = vpack.c.b16 %v951, %v947
    %v1308 = vpack.c.b16 %v952, %v948
    %v1309 = vpack.c.b16 %v953, %v949
    %v1310 = vpack.c.b16 %v958, %v954
    %v1311 = vpack.c.b16 %v959, %v955
    %v1312 = vpack.c.b16 %v960, %v956
    %v1313 = vpack.c.b16 %v961, %v957
    %v1314 = vpack.c.b16 %v966, %v962
    %v1315 = vpack.c.b16 %v967, %v963
    %v1316 = vpack.c.b16 %v968, %v964
    %v1317 = vpack.c.b16 %v969, %v965
    %v1318 = vpack.c.b16 %v974, %v970
    %v1319 = vpack.c.b16 %v975, %v971
    %v1320 = vpack.c.b16 %v976, %v972
    %v1321 = vpack.c.b16 %v977, %v973
    %v1322 = vpack.c.b16 %v982, %v978
    %v1323 = vpack.c.b16 %v983, %v979
    %v1324 = vpack.c.b16 %v984, %v980
    %v1325 = vpack.c.b16 %v985, %v981
    %v1326 = vpack.c.b16 %v990, %v986
    %v1327 = vpack.c.b16 %v991, %v987
    %v1328 = vpack.c.b16 %v992, %v988
    %v1329 = vpack.c.b16 %v993, %v989
    %v1330 = vpack.c.b16 %v998, %v994
    %v1331 = vpack.c.b16 %v999, %v995
    %v1332 = vpack.c.b16 %v1000, %v996
    %v1333 = vpack.c.b16 %v1001, %v997
    %v1334 = vpack.c.b16 %v1006, %v1002
    %v1335 = vpack.c.b16 %v1007, %v1003
    %v1336 = vpack.c.b16 %v1008, %v1004
    %v1337 = vpack.c.b16 %v1009, %v1005
    %v1338 = vpack.c.b16 %v1014, %v1010
    %v1339 = vpack.c.b16 %v1015, %v1011
    %v1340 = vpack.c.b16 %v1016, %v1012
    %v1341 = vpack.c.b16 %v1017, %v1013
    %v1342 = vpack.c.b16 %v1022, %v1018
    %v1343 = vpack.c.b16 %v1023, %v1019
    %v1344 = vpack.c.b16 %v1024, %v1020
    %v1345 = vpack.c.b16 %v1025, %v1021
    %v1346 = vpack.c.b16 %v1030, %v1026
    %v1347 = vpack.c.b16 %v1031, %v1027
    %v1348 = vpack.c.b16 %v1032, %v1028
    %v1349 = vpack.c.b16 %v1033, %v1029
    %v1350 = vpack.c.b16 %v1038, %v1034
    %v1351 = vpack.c.b16 %v1039, %v1035
    %v1352 = vpack.c.b16 %v1040, %v1036
    %v1353 = vpack.c.b16 %v1041, %v1037
    %v1354 = vpack.c.b16 %v1046, %v1042
    %v1355 = vpack.c.b16 %v1047, %v1043
    %v1356 = vpack.c.b16 %v1048, %v1044
    %v1357 = vpack.c.b16 %v1049, %v1045
    %v1358 = vpack.c.b16 %v1054, %v1050
    %v1359 = vpack.c.b16 %v1055, %v1051
    %v1360 = vpack.c.b16 %v1056, %v1052
    %v1361 = vpack.c.b16 %v1057, %v1053
    %v1362 = vpack.c.b16 %v1062, %v1058
    %v1363 = vpack.c.b16 %v1063, %v1059
    %v1364 = vpack.c.b16 %v1064, %v1060
    %v1365 = vpack.c.b16 %v1065, %v1061
    %v1366 = vpack.c.b16 %v1070, %v1066
    %v1367 = vpack.c.b16 %v1071, %v1067
    %v1368 = vpack.c.b16 %v1072, %v1068
    %v1369 = vpack.c.b16 %v1073, %v1069
    %v1370 = vpack.c.b16 %v1078, %v1074
    %v1371 = vpack.c.b16 %v1079, %v1075
    %v1372 = vpack.c.b16 %v1080, %v1076
    %v1373 = vpack.c.b16 %v1081, %v1077
    %v1374 = vpack.c.b16 %v1086, %v1082
    %v1375 = vpack.c.b16 %v1087, %v1083
    %v1376 = vpack.c.b16 %v1088, %v1084
    %v1377 = vpack.c.b16 %v1089, %v1085
    %v1378 = vpack.c.b16 %v1094, %v1090
    %v1379 = vpack.c.b16 %v1095, %v1091
    %v1380 = vpack.c.b16 %v1096, %v1092
    %v1381 = vpack.c.b16 %v1097, %v1093
    %v1382 = vpack.c.b16 %v1102, %v1098
    %v1383 = vpack.c.b16 %v1103, %v1099
    %v1384 = vpack.c.b16 %v1104, %v1100
    %v1385 = vpack.c.b16 %v1105, %v1101
    %v1386 = vpack.c.b16 %v1110, %v1106
    %v1387 = vpack.c.b16 %v1111, %v1107
    %v1388 = vpack.c.b16 %v1112, %v1108
    %v1389 = vpack.c.b16 %v1113, %v1109
    %v1390 = vpack.c.b16 %v1118, %v1114
    %v1391 = vpack.c.b16 %v1119, %v1115
    %v1392 = vpack.c.b16 %v1120, %v1116
    %v1393 = vpack.c.b16 %v1121, %v1117
    %v1394 = vpack.c.b16 %v1126, %v1122
    %v1395 = vpack.c.b16 %v1127, %v1123
    %v1396 = vpack.c.b16 %v1128, %v1124
    %v1397 = vpack.c.b16 %v1129, %v1125
    %v1398 = vpack.c.b16 %v1134, %v1130
    %v1399 = vpack.c.b16 %v1135, %v1131
    %v1400 = vpack.c.b16 %v1136, %v1132
    %v1401 = vpack.c.b16 %v1137, %v1133
    %v1402 = vpack.c.b16 %v1142, %v1138
    %v1403 = vpack.c.b16 %v1143, %v1139
    %v1404 = vpack.c.b16 %v1144, %v1140
    %v1405 = vpack.c.b16 %v1145, %v1141
    %v1406 = vpack.c.b16 %v1150, %v1146
    %v1407 = vpack.c.b16 %v1151, %v1147
    %v1408 = vpack.c.b16 %v1152, %v1148
    %v1409 = vpack.c.b16 %v1153, %v1149
    %1666 = vmatprep.subr.bf16.mxu0 %v1183
    %1667 = vmatpush1.bf16.msra.mxu0 %v1182
    %1668 = vmatprep.subr.bf16.mxu0 %v1179
    %1669 = vmatpush1.bf16.msra.mxu0 %v1178
    %1670 = vmatprep.subr.bf16.mxu0 %v1175
    %1671 = vmatpush1.bf16.msra.mxu0 %v1174
    %1672 = vmatprep.subr.bf16.mxu0 %v1171
    %1673 = vmatpush1.bf16.msra.mxu0 %v1170
    %1674 = vmatprep.subr.bf16.mxu0 %v1167
    %1675 = vmatpush1.bf16.msra.mxu0 %v1166
    %1676 = vmatprep.subr.bf16.mxu0 %v1163
    %1677 = vmatpush1.bf16.msra.mxu0 %v1162
    %1678 = vmatprep.subr.bf16.mxu0 %v1159
    %1679 = vmatpush1.bf16.msra.mxu0 %v1158
    %1680 = vmatprep.subr.bf16.mxu0 %v1155
    %1681 = vmatpush1.bf16.msra.mxu0 %v1154
    %1682 = vmatprep.subr.bf16.mxu0 %v1215
    %1683 = vmatpush2.bf16.msra.mxu0 %v1214
    %1684 = vmatprep.subr.bf16.mxu0 %v1211
    %1685 = vmatpush2.bf16.msra.mxu0 %v1210
    %1686 = vmatprep.subr.bf16.mxu0 %v1207
    %1687 = vmatpush2.bf16.msra.mxu0 %v1206
    %1688 = vmatprep.subr.bf16.mxu0 %v1203
    %1689 = vmatpush2.bf16.msra.mxu0 %v1202
    %1690 = vmatprep.subr.bf16.mxu0 %v1199
    %1691 = vmatpush2.bf16.msra.mxu0 %v1198
    %1692 = vmatprep.subr.bf16.mxu0 %v1195
    %1693 = vmatpush2.bf16.msra.mxu0 %v1194
    %1694 = vmatprep.subr.bf16.mxu0 %v1191
    %1695 = vmatpush2.bf16.msra.mxu0 %v1190
    %1696 = vmatprep.subr.bf16.mxu0 %v1187
    %1697 = vmatpush2.bf16.msra.mxu0 %v1186
    %1698 = vmatprep.mubr.bf16.mxu0 %v379
    %1699 = vmatmul.mubr.bf16.gmra.mxu0 %v378
    %v1700 = vpop.f32.mrf.mxu0
    %v1701 = vadd.f32 0.0, %v1700
    %v1702 = vpop.f32.mrf.mxu0
    %v1703 = vadd.f32 0.0, %v1702
    %v1704 = vpop.f32.mrf.mxu0
    %v1705 = vpop.f32.mrf.mxu0
    %1706 = vdwg.mxu0
    %1707 = vmatprep.subr.bf16.mxu0 %v1247
    %1708 = vmatpush1.bf16.msra.mxu0 %v1246
    %1709 = vmatprep.subr.bf16.mxu0 %v1243
    %1710 = vmatpush1.bf16.msra.mxu0 %v1242
    %1711 = vmatprep.subr.bf16.mxu0 %v1239
    %1712 = vmatpush1.bf16.msra.mxu0 %v1238
    %1713 = vmatprep.subr.bf16.mxu0 %v1235
    %1714 = vmatpush1.bf16.msra.mxu0 %v1234
    %1715 = vmatprep.subr.bf16.mxu0 %v1231
    %1716 = vmatpush1.bf16.msra.mxu0 %v1230
    %1717 = vmatprep.subr.bf16.mxu0 %v1227
    %1718 = vmatpush1.bf16.msra.mxu0 %v1226
    %1719 = vmatprep.subr.bf16.mxu0 %v1223
    %1720 = vmatpush1.bf16.msra.mxu0 %v1222
    %1721 = vmatprep.subr.bf16.mxu0 %v1219
    %1722 = vmatpush1.bf16.msra.mxu0 %v1218
    %1723 = vmatprep.subr.bf16.mxu0 %v1279
    %1724 = vmatpush2.bf16.msra.mxu0 %v1278
    %1725 = vmatprep.subr.bf16.mxu0 %v1275
    %1726 = vmatpush2.bf16.msra.mxu0 %v1274
    %1727 = vmatprep.subr.bf16.mxu0 %v1271
    %1728 = vmatpush2.bf16.msra.mxu0 %v1270
    %1729 = vmatprep.subr.bf16.mxu0 %v1267
    %1730 = vmatpush2.bf16.msra.mxu0 %v1266
    %1731 = vmatprep.subr.bf16.mxu0 %v1263
    %1732 = vmatpush2.bf16.msra.mxu0 %v1262
    %1733 = vmatprep.subr.bf16.mxu0 %v1259
    %1734 = vmatpush2.bf16.msra.mxu0 %v1258
    %1735 = vmatprep.subr.bf16.mxu0 %v1255
    %1736 = vmatpush2.bf16.msra.mxu0 %v1254
    %1737 = vmatprep.subr.bf16.mxu0 %v1251
    %1738 = vmatpush2.bf16.msra.mxu0 %v1250
    %1739 = vmatprep.mubr.bf16.mxu0 %v381
    %1740 = vmatmul.mubr.bf16.gmra.mxu0 %v380
    %v1741 = vpop.f32.mrf.mxu0
    %v1742 = vadd.f32 %v1701, %v1741
    %v1743 = vpop.f32.mrf.mxu0
    %v1744 = vadd.f32 %v1703, %v1743
    %v1745 = vpop.f32.mrf.mxu0
    %v1746 = vpop.f32.mrf.mxu0
    %1747 = vdwg.mxu0
    %1748 = vmatprep.subr.bf16.mxu0 %v1311
    %1749 = vmatpush1.bf16.msra.mxu0 %v1310
    %1750 = vmatprep.subr.bf16.mxu0 %v1307
    %1751 = vmatpush1.bf16.msra.mxu0 %v1306
    %1752 = vmatprep.subr.bf16.mxu0 %v1303
    %1753 = vmatpush1.bf16.msra.mxu0 %v1302
    %1754 = vmatprep.subr.bf16.mxu0 %v1299
    %1755 = vmatpush1.bf16.msra.mxu0 %v1298
    %1756 = vmatprep.subr.bf16.mxu0 %v1295
    %1757 = vmatpush1.bf16.msra.mxu0 %v1294
    %1758 = vmatprep.subr.bf16.mxu0 %v1291
    %1759 = vmatpush1.bf16.msra.mxu0 %v1290
    %1760 = vmatprep.subr.bf16.mxu0 %v1287
    %1761 = vmatpush1.bf16.msra.mxu0 %v1286
    %1762 = vmatprep.subr.bf16.mxu0 %v1283
    %1763 = vmatpush1.bf16.msra.mxu0 %v1282
    %1764 = vmatprep.subr.bf16.mxu0 %v1343
    %1765 = vmatpush2.bf16.msra.mxu0 %v1342
    %1766 = vmatprep.subr.bf16.mxu0 %v1339
    %1767 = vmatpush2.bf16.msra.mxu0 %v1338
    %1768 = vmatprep.subr.bf16.mxu0 %v1335
    %1769 = vmatpush2.bf16.msra.mxu0 %v1334
    %1770 = vmatprep.subr.bf16.mxu0 %v1331
    %1771 = vmatpush2.bf16.msra.mxu0 %v1330
    %1772 = vmatprep.subr.bf16.mxu0 %v1327
    %1773 = vmatpush2.bf16.msra.mxu0 %v1326
    %1774 = vmatprep.subr.bf16.mxu0 %v1323
    %1775 = vmatpush2.bf16.msra.mxu0 %v1322
    %1776 = vmatprep.subr.bf16.mxu0 %v1319
    %1777 = vmatpush2.bf16.msra.mxu0 %v1318
    %1778 = vmatprep.subr.bf16.mxu0 %v1315
    %1779 = vmatpush2.bf16.msra.mxu0 %v1314
    %1780 = vmatprep.mubr.bf16.mxu0 %v383
    %1781 = vmatmul.mubr.bf16.gmra.mxu0 %v382
    %v1782 = vpop.f32.mrf.mxu0
    %v1783 = vadd.f32 %v1742, %v1782
    %v1784 = vpop.f32.mrf.mxu0
    %v1785 = vadd.f32 %v1744, %v1784
    %v1786 = vpop.f32.mrf.mxu0
    %v1787 = vpop.f32.mrf.mxu0
    %1788 = vdwg.mxu0
    %1789 = vmatprep.subr.bf16.mxu0 %v1375
    %1790 = vmatpush1.bf16.msra.mxu0 %v1374
    %1791 = vmatprep.subr.bf16.mxu0 %v1371
    %1792 = vmatpush1.bf16.msra.mxu0 %v1370
    %1793 = vmatprep.subr.bf16.mxu0 %v1367
    %1794 = vmatpush1.bf16.msra.mxu0 %v1366
    %1795 = vmatprep.subr.bf16.mxu0 %v1363
    %1796 = vmatpush1.bf16.msra.mxu0 %v1362
    %1797 = vmatprep.subr.bf16.mxu0 %v1359
    %1798 = vmatpush1.bf16.msra.mxu0 %v1358
    %1799 = vmatprep.subr.bf16.mxu0 %v1355
    %1800 = vmatpush1.bf16.msra.mxu0 %v1354
    %1801 = vmatprep.subr.bf16.mxu0 %v1351
    %1802 = vmatpush1.bf16.msra.mxu0 %v1350
    %1803 = vmatprep.subr.bf16.mxu0 %v1347
    %1804 = vmatpush1.bf16.msra.mxu0 %v1346
    %1805 = vmatprep.subr.bf16.mxu0 %v1407
    %1806 = vmatpush2.bf16.msra.mxu0 %v1406
    %1807 = vmatprep.subr.bf16.mxu0 %v1403
    %1808 = vmatpush2.bf16.msra.mxu0 %v1402
    %1809 = vmatprep.subr.bf16.mxu0 %v1399
    %1810 = vmatpush2.bf16.msra.mxu0 %v1398
    %1811 = vmatprep.subr.bf16.mxu0 %v1395
    %1812 = vmatpush2.bf16.msra.mxu0 %v1394
    %1813 = vmatprep.subr.bf16.mxu0 %v1391
    %1814 = vmatpush2.bf16.msra.mxu0 %v1390
    %1815 = vmatprep.subr.bf16.mxu0 %v1387
    %1816 = vmatpush2.bf16.msra.mxu0 %v1386
    %1817 = vmatprep.subr.bf16.mxu0 %v1383
    %1818 = vmatpush2.bf16.msra.mxu0 %v1382
    %1819 = vmatprep.subr.bf16.mxu0 %v1379
    %1820 = vmatpush2.bf16.msra.mxu0 %v1378
    %1821 = vmatprep.mubr.bf16.mxu0 %v385
    %1822 = vmatmul.mubr.bf16.gmra.mxu0 %v384
    %v1823 = vpop.f32.mrf.mxu0
    %v1824 = vadd.f32 %v1783, %v1823
    %v1825 = vpop.f32.mrf.mxu0
    %v1826 = vadd.f32 %v1785, %v1825
    %v1827 = vpop.f32.mrf.mxu0
    %v1828 = vpop.f32.mrf.mxu0
    %1829 = vdwg.mxu0
    %1830 = vmatprep.subr.bf16.mxu0 %v1185
    %1831 = vmatpush1.bf16.msra.mxu0 %v1184
    %1832 = vmatprep.subr.bf16.mxu0 %v1181
    %1833 = vmatpush1.bf16.msra.mxu0 %v1180
    %1834 = vmatprep.subr.bf16.mxu0 %v1177
    %1835 = vmatpush1.bf16.msra.mxu0 %v1176
    %1836 = vmatprep.subr.bf16.mxu0 %v1173
    %1837 = vmatpush1.bf16.msra.mxu0 %v1172
    %1838 = vmatprep.subr.bf16.mxu0 %v1169
    %1839 = vmatpush1.bf16.msra.mxu0 %v1168
    %1840 = vmatprep.subr.bf16.mxu0 %v1165
    %1841 = vmatpush1.bf16.msra.mxu0 %v1164
    %1842 = vmatprep.subr.bf16.mxu0 %v1161
    %1843 = vmatpush1.bf16.msra.mxu0 %v1160
    %1844 = vmatprep.subr.bf16.mxu0 %v1157
    %1845 = vmatpush1.bf16.msra.mxu0 %v1156
    %1846 = vmatprep.subr.bf16.mxu0 %v1217
    %1847 = vmatpush2.bf16.msra.mxu0 %v1216
    %1848 = vmatprep.subr.bf16.mxu0 %v1213
    %1849 = vmatpush2.bf16.msra.mxu0 %v1212
    %1850 = vmatprep.subr.bf16.mxu0 %v1209
    %1851 = vmatpush2.bf16.msra.mxu0 %v1208
    %1852 = vmatprep.subr.bf16.mxu0 %v1205
    %1853 = vmatpush2.bf16.msra.mxu0 %v1204
    %1854 = vmatprep.subr.bf16.mxu0 %v1201
    %1855 = vmatpush2.bf16.msra.mxu0 %v1200
    %1856 = vmatprep.subr.bf16.mxu0 %v1197
    %1857 = vmatpush2.bf16.msra.mxu0 %v1196
    %1858 = vmatprep.subr.bf16.mxu0 %v1193
    %1859 = vmatpush2.bf16.msra.mxu0 %v1192
    %1860 = vmatprep.subr.bf16.mxu0 %v1189
    %1861 = vmatpush2.bf16.msra.mxu0 %v1188
    %1862 = vmatprep.mubr.bf16.mxu0 %v379
    %1863 = vmatmul.mubr.bf16.gmra.mxu0 %v378
    %v1864 = vpop.f32.mrf.mxu0
    %v1865 = vadd.f32 0.0, %v1864
    %v1866 = vpop.f32.mrf.mxu0
    %v1867 = vadd.f32 0.0, %v1866
    %v1868 = vpop.f32.mrf.mxu0
    %v1869 = vpop.f32.mrf.mxu0
    %1870 = vdwg.mxu0
    %1871 = vmatprep.subr.bf16.mxu0 %v1249
    %1872 = vmatpush1.bf16.msra.mxu0 %v1248
    %1873 = vmatprep.subr.bf16.mxu0 %v1245
    %1874 = vmatpush1.bf16.msra.mxu0 %v1244
    %1875 = vmatprep.subr.bf16.mxu0 %v1241
    %1876 = vmatpush1.bf16.msra.mxu0 %v1240
    %1877 = vmatprep.subr.bf16.mxu0 %v1237
    %1878 = vmatpush1.bf16.msra.mxu0 %v1236
    %1879 = vmatprep.subr.bf16.mxu0 %v1233
    %1880 = vmatpush1.bf16.msra.mxu0 %v1232
    %1881 = vmatprep.subr.bf16.mxu0 %v1229
    %1882 = vmatpush1.bf16.msra.mxu0 %v1228
    %1883 = vmatprep.subr.bf16.mxu0 %v1225
    %1884 = vmatpush1.bf16.msra.mxu0 %v1224
    %1885 = vmatprep.subr.bf16.mxu0 %v1221
    %1886 = vmatpush1.bf16.msra.mxu0 %v1220
    %1887 = vmatprep.subr.bf16.mxu0 %v1281
    %1888 = vmatpush2.bf16.msra.mxu0 %v1280
    %1889 = vmatprep.subr.bf16.mxu0 %v1277
    %1890 = vmatpush2.bf16.msra.mxu0 %v1276
    %1891 = vmatprep.subr.bf16.mxu0 %v1273
    %1892 = vmatpush2.bf16.msra.mxu0 %v1272
    %1893 = vmatprep.subr.bf16.mxu0 %v1269
    %1894 = vmatpush2.bf16.msra.mxu0 %v1268
    %1895 = vmatprep.subr.bf16.mxu0 %v1265
    %1896 = vmatpush2.bf16.msra.mxu0 %v1264
    %1897 = vmatprep.subr.bf16.mxu0 %v1261
    %1898 = vmatpush2.bf16.msra.mxu0 %v1260
    %1899 = vmatprep.subr.bf16.mxu0 %v1257
    %1900 = vmatpush2.bf16.msra.mxu0 %v1256
    %1901 = vmatprep.subr.bf16.mxu0 %v1253
    %1902 = vmatpush2.bf16.msra.mxu0 %v1252
    %1903 = vmatprep.mubr.bf16.mxu0 %v381
    %1904 = vmatmul.mubr.bf16.gmra.mxu0 %v380
    %v1905 = vpop.f32.mrf.mxu0
    %v1906 = vadd.f32 %v1865, %v1905
    %v1907 = vpop.f32.mrf.mxu0
    %v1908 = vadd.f32 %v1867, %v1907
    %v1909 = vpop.f32.mrf.mxu0
    %v1910 = vpop.f32.mrf.mxu0
    %1911 = vdwg.mxu0
    %1912 = vmatprep.subr.bf16.mxu0 %v1313
    %1913 = vmatpush1.bf16.msra.mxu0 %v1312
    %1914 = vmatprep.subr.bf16.mxu0 %v1309
    %1915 = vmatpush1.bf16.msra.mxu0 %v1308
    %1916 = vmatprep.subr.bf16.mxu0 %v1305
    %1917 = vmatpush1.bf16.msra.mxu0 %v1304
    %1918 = vmatprep.subr.bf16.mxu0 %v1301
    %1919 = vmatpush1.bf16.msra.mxu0 %v1300
    %1920 = vmatprep.subr.bf16.mxu0 %v1297
    %1921 = vmatpush1.bf16.msra.mxu0 %v1296
    %1922 = vmatprep.subr.bf16.mxu0 %v1293
    %1923 = vmatpush1.bf16.msra.mxu0 %v1292
    %1924 = vmatprep.subr.bf16.mxu0 %v1289
    %1925 = vmatpush1.bf16.msra.mxu0 %v1288
    %1926 = vmatprep.subr.bf16.mxu0 %v1285
    %1927 = vmatpush1.bf16.msra.mxu0 %v1284
    %1928 = vmatprep.subr.bf16.mxu0 %v1345
    %1929 = vmatpush2.bf16.msra.mxu0 %v1344
    %1930 = vmatprep.subr.bf16.mxu0 %v1341
    %1931 = vmatpush2.bf16.msra.mxu0 %v1340
    %1932 = vmatprep.subr.bf16.mxu0 %v1337
    %1933 = vmatpush2.bf16.msra.mxu0 %v1336
    %1934 = vmatprep.subr.bf16.mxu0 %v1333
    %1935 = vmatpush2.bf16.msra.mxu0 %v1332
    %1936 = vmatprep.subr.bf16.mxu0 %v1329
    %1937 = vmatpush2.bf16.msra.mxu0 %v1328
    %1938 = vmatprep.subr.bf16.mxu0 %v1325
    %1939 = vmatpush2.bf16.msra.mxu0 %v1324
    %1940 = vmatprep.subr.bf16.mxu0 %v1321
    %1941 = vmatpush2.bf16.msra.mxu0 %v1320
    %1942 = vmatprep.subr.bf16.mxu0 %v1317
    %1943 = vmatpush2.bf16.msra.mxu0 %v1316
    %1944 = vmatprep.mubr.bf16.mxu0 %v383
    %1945 = vmatmul.mubr.bf16.gmra.mxu0 %v382
    %v1946 = vpop.f32.mrf.mxu0
    %v1947 = vadd.f32 %v1906, %v1946
    %v1948 = vpop.f32.mrf.mxu0
    %v1949 = vadd.f32 %v1908, %v1948
    %v1950 = vpop.f32.mrf.mxu0
    %v1951 = vpop.f32.mrf.mxu0
    %1952 = vdwg.mxu0
    %1953 = vmatprep.subr.bf16.mxu0 %v1377
    %1954 = vmatpush1.bf16.msra.mxu0 %v1376
    %1955 = vmatprep.subr.bf16.mxu0 %v1373
    %1956 = vmatpush1.bf16.msra.mxu0 %v1372
    %1957 = vmatprep.subr.bf16.mxu0 %v1369
    %1958 = vmatpush1.bf16.msra.mxu0 %v1368
    %1959 = vmatprep.subr.bf16.mxu0 %v1365
    %1960 = vmatpush1.bf16.msra.mxu0 %v1364
    %1961 = vmatprep.subr.bf16.mxu0 %v1361
    %1962 = vmatpush1.bf16.msra.mxu0 %v1360
    %1963 = vmatprep.subr.bf16.mxu0 %v1357
    %1964 = vmatpush1.bf16.msra.mxu0 %v1356
    %1965 = vmatprep.subr.bf16.mxu0 %v1353
    %1966 = vmatpush1.bf16.msra.mxu0 %v1352
    %1967 = vmatprep.subr.bf16.mxu0 %v1349
    %1968 = vmatpush1.bf16.msra.mxu0 %v1348
    %1969 = vmatprep.subr.bf16.mxu0 %v1409
    %1970 = vmatpush2.bf16.msra.mxu0 %v1408
    %1971 = vmatprep.subr.bf16.mxu0 %v1405
    %1972 = vmatpush2.bf16.msra.mxu0 %v1404
    %1973 = vmatprep.subr.bf16.mxu0 %v1401
    %1974 = vmatpush2.bf16.msra.mxu0 %v1400
    %1975 = vmatprep.subr.bf16.mxu0 %v1397
    %1976 = vmatpush2.bf16.msra.mxu0 %v1396
    %1977 = vmatprep.subr.bf16.mxu0 %v1393
    %1978 = vmatpush2.bf16.msra.mxu0 %v1392
    %1979 = vmatprep.subr.bf16.mxu0 %v1389
    %1980 = vmatpush2.bf16.msra.mxu0 %v1388
    %1981 = vmatprep.subr.bf16.mxu0 %v1385
    %1982 = vmatpush2.bf16.msra.mxu0 %v1384
    %1983 = vmatprep.subr.bf16.mxu0 %v1381
    %1984 = vmatpush2.bf16.msra.mxu0 %v1380
    %1985 = vmatprep.mubr.bf16.mxu0 %v385
    %1986 = vmatmul.mubr.bf16.gmra.mxu0 %v384
    %v1987 = vpop.f32.mrf.mxu0
    %v1988 = vadd.f32 %v1947, %v1987
    %v1989 = vpop.f32.mrf.mxu0
    %v1990 = vadd.f32 %v1949, %v1989
    %v1991 = vpop.f32.mrf.mxu0
    %v1992 = vpop.f32.mrf.mxu0
    %1993 = vdwg.mxu0
    %v1994 = vmul.f32 %v1824, %v1824
    %v1995 = vmul.f32 %v1826, %v1826
    %v1996 = vmul.f32 %v1988, %v1988
    %v1997 = vmul.f32 %v1990, %v1990
    %vm1998 = vcmask 1041408
    %v1999 = vsel %vm1998, %v1994, 0.0
    %v2000 = vsel %vm1998, %v1995, 0.0
    %v2001 = vadd.f32 %v1999, %v2000
    %v2002 = vsel %vm1998, %v1996, 0.0
    %v2003 = vadd.f32 %v2001, %v2002
    %v2004 = vsel %vm1998, %v1997, 0.0
    %v2005 = vadd.f32 %v2003, %v2004
    %2006 = vadd.xlane.f32.xlu0 %v2005
    %v2007 = vpop.xlane.xlu0 %2006
    %v2008 = vmax.f32 %v2007, 1e-24
    %v2009 = vrsqrt.pop %v2008
    %v2010 = vmul.f32 %v1824, %v2009
    %v2011 = vmul.f32 %v1826, %v2009
    %v2012 = vmul.f32 %v1988, %v2009
    %v2013 = vmul.f32 %v1990, %v2009
    %v2014 = vld [vmem:[#allocation6] sm:$0xff]
    %v2015 = vld [vmem:[#allocation6 + $0x8] sm:$0xff]
    %v2018 = vcombine.high %v2014, %v2014
    %v2020 = vunpack.c.l.s4 1983009808
    %v2021 = vunpack.c.0.s8 %v2020
    %v2022 = vlaneseq
    %v2023 = vshrl.u32 %v2022, 7
    %v2024 = vsub.s32 %v2021, %v2023
    %v2025 = vrot.slane %v2014, %v2024
    %v2027 = vunpack.c.l.s4 1983009808
    %v2028 = vunpack.c.0.s8 %v2027
    %v2029 = vlaneseq
    %v2030 = vshrl.u32 %v2029, 7
    %v2031 = vsub.s32 %v2028, %v2030
    %v2032 = vrot.slane %v2018, %v2031
    %v2033 = vcombine.high %v2025, %v2025
    %v2034 = vcombine.high %v2032, %v2032
    %v2035 = vcombine.high %v2015, %v2015
    %v2037 = vunpack.c.l.s4 1983009808
    %v2038 = vunpack.c.0.s8 %v2037
    %v2039 = vlaneseq
    %v2040 = vshrl.u32 %v2039, 7
    %v2041 = vsub.s32 %v2038, %v2040
    %v2042 = vrot.slane %v2015, %v2041
    %v2044 = vunpack.c.l.s4 1983009808
    %v2045 = vunpack.c.0.s8 %v2044
    %v2046 = vlaneseq
    %v2047 = vshrl.u32 %v2046, 7
    %v2048 = vsub.s32 %v2045, %v2047
    %v2049 = vrot.slane %v2035, %v2048
    %v2050 = vcombine.high %v2042, %v2042
    %v2051 = vcombine.high %v2049, %v2049
    %v2060 = vpack.c.bf16 %v2025, %v2025
    %v2061 = vpack.c.bf16 %v2033, %v2033
    %v2062 = vpack.c.bf16 %v2032, %v2032
    %v2063 = vpack.c.bf16 %v2034, %v2034
    %v2064 = vpack.c.bf16 %v2042, %v2042
    %v2065 = vpack.c.bf16 %v2050, %v2050
    %v2066 = vpack.c.bf16 %v2049, %v2049
    %v2067 = vpack.c.bf16 %v2051, %v2051
    %2068 = vmatprep.subr.bf16.mxu0 %v1183
    %2069 = vmatpush1.bf16.msra.mxu0 %v1182
    %2070 = vmatprep.subr.bf16.mxu0 %v1179
    %2071 = vmatpush1.bf16.msra.mxu0 %v1178
    %2072 = vmatprep.subr.bf16.mxu0 %v1175
    %2073 = vmatpush1.bf16.msra.mxu0 %v1174
    %2074 = vmatprep.subr.bf16.mxu0 %v1171
    %2075 = vmatpush1.bf16.msra.mxu0 %v1170
    %2076 = vmatprep.subr.bf16.mxu0 %v1167
    %2077 = vmatpush1.bf16.msra.mxu0 %v1166
    %2078 = vmatprep.subr.bf16.mxu0 %v1163
    %2079 = vmatpush1.bf16.msra.mxu0 %v1162
    %2080 = vmatprep.subr.bf16.mxu0 %v1159
    %2081 = vmatpush1.bf16.msra.mxu0 %v1158
    %2082 = vmatprep.subr.bf16.mxu0 %v1155
    %2083 = vmatpush1.bf16.msra.mxu0 %v1154
    %2084 = vmatprep.subr.bf16.mxu0 %v1215
    %2085 = vmatpush2.bf16.msra.mxu0 %v1214
    %2086 = vmatprep.subr.bf16.mxu0 %v1211
    %2087 = vmatpush2.bf16.msra.mxu0 %v1210
    %2088 = vmatprep.subr.bf16.mxu0 %v1207
    %2089 = vmatpush2.bf16.msra.mxu0 %v1206
    %2090 = vmatprep.subr.bf16.mxu0 %v1203
    %2091 = vmatpush2.bf16.msra.mxu0 %v1202
    %2092 = vmatprep.subr.bf16.mxu0 %v1199
    %2093 = vmatpush2.bf16.msra.mxu0 %v1198
    %2094 = vmatprep.subr.bf16.mxu0 %v1195
    %2095 = vmatpush2.bf16.msra.mxu0 %v1194
    %2096 = vmatprep.subr.bf16.mxu0 %v1191
    %2097 = vmatpush2.bf16.msra.mxu0 %v1190
    %2098 = vmatprep.subr.bf16.mxu0 %v1187
    %2099 = vmatpush2.bf16.msra.mxu0 %v1186
    %2100 = vmatprep.mubr.bf16.mxu0 %v2061
    %2101 = vmatmul.mubr.bf16.gmra.mxu0 %v2060
    %v2102 = vpop.f32.mrf.mxu0
    %v2103 = vadd.f32 0.0, %v2102
    %v2104 = vpop.f32.mrf.mxu0
    %v2105 = vadd.f32 0.0, %v2104
    %v2106 = vpop.f32.mrf.mxu0
    %v2107 = vpop.f32.mrf.mxu0
    %2108 = vdwg.mxu0
    %2109 = vmatprep.subr.bf16.mxu0 %v1247
    %2110 = vmatpush1.bf16.msra.mxu0 %v1246
    %2111 = vmatprep.subr.bf16.mxu0 %v1243
    %2112 = vmatpush1.bf16.msra.mxu0 %v1242
    %2113 = vmatprep.subr.bf16.mxu0 %v1239
    %2114 = vmatpush1.bf16.msra.mxu0 %v1238
    %2115 = vmatprep.subr.bf16.mxu0 %v1235
    %2116 = vmatpush1.bf16.msra.mxu0 %v1234
    %2117 = vmatprep.subr.bf16.mxu0 %v1231
    %2118 = vmatpush1.bf16.msra.mxu0 %v1230
    %2119 = vmatprep.subr.bf16.mxu0 %v1227
    %2120 = vmatpush1.bf16.msra.mxu0 %v1226
    %2121 = vmatprep.subr.bf16.mxu0 %v1223
    %2122 = vmatpush1.bf16.msra.mxu0 %v1222
    %2123 = vmatprep.subr.bf16.mxu0 %v1219
    %2124 = vmatpush1.bf16.msra.mxu0 %v1218
    %2125 = vmatprep.subr.bf16.mxu0 %v1279
    %2126 = vmatpush2.bf16.msra.mxu0 %v1278
    %2127 = vmatprep.subr.bf16.mxu0 %v1275
    %2128 = vmatpush2.bf16.msra.mxu0 %v1274
    %2129 = vmatprep.subr.bf16.mxu0 %v1271
    %2130 = vmatpush2.bf16.msra.mxu0 %v1270
    %2131 = vmatprep.subr.bf16.mxu0 %v1267
    %2132 = vmatpush2.bf16.msra.mxu0 %v1266
    %2133 = vmatprep.subr.bf16.mxu0 %v1263
    %2134 = vmatpush2.bf16.msra.mxu0 %v1262
    %2135 = vmatprep.subr.bf16.mxu0 %v1259
    %2136 = vmatpush2.bf16.msra.mxu0 %v1258
    %2137 = vmatprep.subr.bf16.mxu0 %v1255
    %2138 = vmatpush2.bf16.msra.mxu0 %v1254
    %2139 = vmatprep.subr.bf16.mxu0 %v1251
    %2140 = vmatpush2.bf16.msra.mxu0 %v1250
    %2141 = vmatprep.mubr.bf16.mxu0 %v2063
    %2142 = vmatmul.mubr.bf16.gmra.mxu0 %v2062
    %v2143 = vpop.f32.mrf.mxu0
    %v2144 = vadd.f32 %v2103, %v2143
    %v2145 = vpop.f32.mrf.mxu0
    %v2146 = vadd.f32 %v2105, %v2145
    %v2147 = vpop.f32.mrf.mxu0
    %v2148 = vpop.f32.mrf.mxu0
    %2149 = vdwg.mxu0
    %2150 = vmatprep.subr.bf16.mxu0 %v1311
    %2151 = vmatpush1.bf16.msra.mxu0 %v1310
    %2152 = vmatprep.subr.bf16.mxu0 %v1307
    %2153 = vmatpush1.bf16.msra.mxu0 %v1306
    %2154 = vmatprep.subr.bf16.mxu0 %v1303
    %2155 = vmatpush1.bf16.msra.mxu0 %v1302
    %2156 = vmatprep.subr.bf16.mxu0 %v1299
    %2157 = vmatpush1.bf16.msra.mxu0 %v1298
    %2158 = vmatprep.subr.bf16.mxu0 %v1295
    %2159 = vmatpush1.bf16.msra.mxu0 %v1294
    %2160 = vmatprep.subr.bf16.mxu0 %v1291
    %2161 = vmatpush1.bf16.msra.mxu0 %v1290
    %2162 = vmatprep.subr.bf16.mxu0 %v1287
    %2163 = vmatpush1.bf16.msra.mxu0 %v1286
    %2164 = vmatprep.subr.bf16.mxu0 %v1283
    %2165 = vmatpush1.bf16.msra.mxu0 %v1282
    %2166 = vmatprep.subr.bf16.mxu0 %v1343
    %2167 = vmatpush2.bf16.msra.mxu0 %v1342
    %2168 = vmatprep.subr.bf16.mxu0 %v1339
    %2169 = vmatpush2.bf16.msra.mxu0 %v1338
    %2170 = vmatprep.subr.bf16.mxu0 %v1335
    %2171 = vmatpush2.bf16.msra.mxu0 %v1334
    %2172 = vmatprep.subr.bf16.mxu0 %v1331
    %2173 = vmatpush2.bf16.msra.mxu0 %v1330
    %2174 = vmatprep.subr.bf16.mxu0 %v1327
    %2175 = vmatpush2.bf16.msra.mxu0 %v1326
    %2176 = vmatprep.subr.bf16.mxu0 %v1323
    %2177 = vmatpush2.bf16.msra.mxu0 %v1322
    %2178 = vmatprep.subr.bf16.mxu0 %v1319
    %2179 = vmatpush2.bf16.msra.mxu0 %v1318
    %2180 = vmatprep.subr.bf16.mxu0 %v1315
    %2181 = vmatpush2.bf16.msra.mxu0 %v1314
    %2182 = vmatprep.mubr.bf16.mxu0 %v2065
    %2183 = vmatmul.mubr.bf16.gmra.mxu0 %v2064
    %v2184 = vpop.f32.mrf.mxu0
    %v2185 = vadd.f32 %v2144, %v2184
    %v2186 = vpop.f32.mrf.mxu0
    %v2187 = vadd.f32 %v2146, %v2186
    %v2188 = vpop.f32.mrf.mxu0
    %v2189 = vpop.f32.mrf.mxu0
    %2190 = vdwg.mxu0
    %2191 = vmatprep.subr.bf16.mxu0 %v1375
    %2192 = vmatpush1.bf16.msra.mxu0 %v1374
    %2193 = vmatprep.subr.bf16.mxu0 %v1371
    %2194 = vmatpush1.bf16.msra.mxu0 %v1370
    %2195 = vmatprep.subr.bf16.mxu0 %v1367
    %2196 = vmatpush1.bf16.msra.mxu0 %v1366
    %2197 = vmatprep.subr.bf16.mxu0 %v1363
    %2198 = vmatpush1.bf16.msra.mxu0 %v1362
    %2199 = vmatprep.subr.bf16.mxu0 %v1359
    %2200 = vmatpush1.bf16.msra.mxu0 %v1358
    %2201 = vmatprep.subr.bf16.mxu0 %v1355
    %2202 = vmatpush1.bf16.msra.mxu0 %v1354
    %2203 = vmatprep.subr.bf16.mxu0 %v1351
    %2204 = vmatpush1.bf16.msra.mxu0 %v1350
    %2205 = vmatprep.subr.bf16.mxu0 %v1347
    %2206 = vmatpush1.bf16.msra.mxu0 %v1346
    %2207 = vmatprep.subr.bf16.mxu0 %v1407
    %2208 = vmatpush2.bf16.msra.mxu0 %v1406
    %2209 = vmatprep.subr.bf16.mxu0 %v1403
    %2210 = vmatpush2.bf16.msra.mxu0 %v1402
    %2211 = vmatprep.subr.bf16.mxu0 %v1399
    %2212 = vmatpush2.bf16.msra.mxu0 %v1398
    %2213 = vmatprep.subr.bf16.mxu0 %v1395
    %2214 = vmatpush2.bf16.msra.mxu0 %v1394
    %2215 = vmatprep.subr.bf16.mxu0 %v1391
    %2216 = vmatpush2.bf16.msra.mxu0 %v1390
    %2217 = vmatprep.subr.bf16.mxu0 %v1387
    %2218 = vmatpush2.bf16.msra.mxu0 %v1386
    %2219 = vmatprep.subr.bf16.mxu0 %v1383
    %2220 = vmatpush2.bf16.msra.mxu0 %v1382
    %2221 = vmatprep.subr.bf16.mxu0 %v1379
    %2222 = vmatpush2.bf16.msra.mxu0 %v1378
    %2223 = vmatprep.mubr.bf16.mxu0 %v2067
    %2224 = vmatmul.mubr.bf16.gmra.mxu0 %v2066
    %v2225 = vpop.f32.mrf.mxu0
    %v2226 = vadd.f32 %v2185, %v2225
    %v2227 = vpop.f32.mrf.mxu0
    %v2228 = vadd.f32 %v2187, %v2227
    %v2229 = vpop.f32.mrf.mxu0
    %v2230 = vpop.f32.mrf.mxu0
    %2231 = vdwg.mxu0
    %2232 = vmatprep.subr.bf16.mxu0 %v1185
    %2233 = vmatpush1.bf16.msra.mxu0 %v1184
    %2234 = vmatprep.subr.bf16.mxu0 %v1181
    %2235 = vmatpush1.bf16.msra.mxu0 %v1180
    %2236 = vmatprep.subr.bf16.mxu0 %v1177
    %2237 = vmatpush1.bf16.msra.mxu0 %v1176
    %2238 = vmatprep.subr.bf16.mxu0 %v1173
    %2239 = vmatpush1.bf16.msra.mxu0 %v1172
    %2240 = vmatprep.subr.bf16.mxu0 %v1169
    %2241 = vmatpush1.bf16.msra.mxu0 %v1168
    %2242 = vmatprep.subr.bf16.mxu0 %v1165
    %2243 = vmatpush1.bf16.msra.mxu0 %v1164
    %2244 = vmatprep.subr.bf16.mxu0 %v1161
    %2245 = vmatpush1.bf16.msra.mxu0 %v1160
    %2246 = vmatprep.subr.bf16.mxu0 %v1157
    %2247 = vmatpush1.bf16.msra.mxu0 %v1156
    %2248 = vmatprep.subr.bf16.mxu0 %v1217
    %2249 = vmatpush2.bf16.msra.mxu0 %v1216
    %2250 = vmatprep.subr.bf16.mxu0 %v1213
    %2251 = vmatpush2.bf16.msra.mxu0 %v1212
    %2252 = vmatprep.subr.bf16.mxu0 %v1209
    %2253 = vmatpush2.bf16.msra.mxu0 %v1208
    %2254 = vmatprep.subr.bf16.mxu0 %v1205
    %2255 = vmatpush2.bf16.msra.mxu0 %v1204
    %2256 = vmatprep.subr.bf16.mxu0 %v1201
    %2257 = vmatpush2.bf16.msra.mxu0 %v1200
    %2258 = vmatprep.subr.bf16.mxu0 %v1197
    %2259 = vmatpush2.bf16.msra.mxu0 %v1196
    %2260 = vmatprep.subr.bf16.mxu0 %v1193
    %2261 = vmatpush2.bf16.msra.mxu0 %v1192
    %2262 = vmatprep.subr.bf16.mxu0 %v1189
    %2263 = vmatpush2.bf16.msra.mxu0 %v1188
    %2264 = vmatprep.mubr.bf16.mxu0 %v2061
    %2265 = vmatmul.mubr.bf16.gmra.mxu0 %v2060
    %v2266 = vpop.f32.mrf.mxu0
    %v2267 = vadd.f32 0.0, %v2266
    %v2268 = vpop.f32.mrf.mxu0
    %v2269 = vadd.f32 0.0, %v2268
    %v2270 = vpop.f32.mrf.mxu0
    %v2271 = vpop.f32.mrf.mxu0
    %2272 = vdwg.mxu0
    %2273 = vmatprep.subr.bf16.mxu0 %v1249
    %2274 = vmatpush1.bf16.msra.mxu0 %v1248
    %2275 = vmatprep.subr.bf16.mxu0 %v1245
    %2276 = vmatpush1.bf16.msra.mxu0 %v1244
    %2277 = vmatprep.subr.bf16.mxu0 %v1241
    %2278 = vmatpush1.bf16.msra.mxu0 %v1240
    %2279 = vmatprep.subr.bf16.mxu0 %v1237
    %2280 = vmatpush1.bf16.msra.mxu0 %v1236
    %2281 = vmatprep.subr.bf16.mxu0 %v1233
    %2282 = vmatpush1.bf16.msra.mxu0 %v1232
    %2283 = vmatprep.subr.bf16.mxu0 %v1229
    %2284 = vmatpush1.bf16.msra.mxu0 %v1228
    %2285 = vmatprep.subr.bf16.mxu0 %v1225
    %2286 = vmatpush1.bf16.msra.mxu0 %v1224
    %2287 = vmatprep.subr.bf16.mxu0 %v1221
    %2288 = vmatpush1.bf16.msra.mxu0 %v1220
    %2289 = vmatprep.subr.bf16.mxu0 %v1281
    %2290 = vmatpush2.bf16.msra.mxu0 %v1280
    %2291 = vmatprep.subr.bf16.mxu0 %v1277
    %2292 = vmatpush2.bf16.msra.mxu0 %v1276
    %2293 = vmatprep.subr.bf16.mxu0 %v1273
    %2294 = vmatpush2.bf16.msra.mxu0 %v1272
    %2295 = vmatprep.subr.bf16.mxu0 %v1269
    %2296 = vmatpush2.bf16.msra.mxu0 %v1268
    %2297 = vmatprep.subr.bf16.mxu0 %v1265
    %2298 = vmatpush2.bf16.msra.mxu0 %v1264
    %2299 = vmatprep.subr.bf16.mxu0 %v1261
    %2300 = vmatpush2.bf16.msra.mxu0 %v1260
    %2301 = vmatprep.subr.bf16.mxu0 %v1257
    %2302 = vmatpush2.bf16.msra.mxu0 %v1256
    %2303 = vmatprep.subr.bf16.mxu0 %v1253
    %2304 = vmatpush2.bf16.msra.mxu0 %v1252
    %2305 = vmatprep.mubr.bf16.mxu0 %v2063
    %2306 = vmatmul.mubr.bf16.gmra.mxu0 %v2062
    %v2307 = vpop.f32.mrf.mxu0
    %v2308 = vadd.f32 %v2267, %v2307
    %v2309 = vpop.f32.mrf.mxu0
    %v2310 = vadd.f32 %v2269, %v2309
    %v2311 = vpop.f32.mrf.mxu0
    %v2312 = vpop.f32.mrf.mxu0
    %2313 = vdwg.mxu0
    %2314 = vmatprep.subr.bf16.mxu0 %v1313
    %2315 = vmatpush1.bf16.msra.mxu0 %v1312
    %2316 = vmatprep.subr.bf16.mxu0 %v1309
    %2317 = vmatpush1.bf16.msra.mxu0 %v1308
    %2318 = vmatprep.subr.bf16.mxu0 %v1305
    %2319 = vmatpush1.bf16.msra.mxu0 %v1304
    %2320 = vmatprep.subr.bf16.mxu0 %v1301
    %2321 = vmatpush1.bf16.msra.mxu0 %v1300
    %2322 = vmatprep.subr.bf16.mxu0 %v1297
    %2323 = vmatpush1.bf16.msra.mxu0 %v1296
    %2324 = vmatprep.subr.bf16.mxu0 %v1293
    %2325 = vmatpush1.bf16.msra.mxu0 %v1292
    %2326 = vmatprep.subr.bf16.mxu0 %v1289
    %2327 = vmatpush1.bf16.msra.mxu0 %v1288
    %2328 = vmatprep.subr.bf16.mxu0 %v1285
    %2329 = vmatpush1.bf16.msra.mxu0 %v1284
    %2330 = vmatprep.subr.bf16.mxu0 %v1345
    %2331 = vmatpush2.bf16.msra.mxu0 %v1344
    %2332 = vmatprep.subr.bf16.mxu0 %v1341
    %2333 = vmatpush2.bf16.msra.mxu0 %v1340
    %2334 = vmatprep.subr.bf16.mxu0 %v1337
    %2335 = vmatpush2.bf16.msra.mxu0 %v1336
    %2336 = vmatprep.subr.bf16.mxu0 %v1333
    %2337 = vmatpush2.bf16.msra.mxu0 %v1332
    %2338 = vmatprep.subr.bf16.mxu0 %v1329
    %2339 = vmatpush2.bf16.msra.mxu0 %v1328
    %2340 = vmatprep.subr.bf16.mxu0 %v1325
    %2341 = vmatpush2.bf16.msra.mxu0 %v1324
    %2342 = vmatprep.subr.bf16.mxu0 %v1321
    %2343 = vmatpush2.bf16.msra.mxu0 %v1320
    %2344 = vmatprep.subr.bf16.mxu0 %v1317
    %2345 = vmatpush2.bf16.msra.mxu0 %v1316
    %2346 = vmatprep.mubr.bf16.mxu0 %v2065
    %2347 = vmatmul.mubr.bf16.gmra.mxu0 %v2064
    %v2348 = vpop.f32.mrf.mxu0
    %v2349 = vadd.f32 %v2308, %v2348
    %v2350 = vpop.f32.mrf.mxu0
    %v2351 = vadd.f32 %v2310, %v2350
    %v2352 = vpop.f32.mrf.mxu0
    %v2353 = vpop.f32.mrf.mxu0
    %2354 = vdwg.mxu0
    %2355 = vmatprep.subr.bf16.mxu0 %v1377
    %2356 = vmatpush1.bf16.msra.mxu0 %v1376
    %2357 = vmatprep.subr.bf16.mxu0 %v1373
    %2358 = vmatpush1.bf16.msra.mxu0 %v1372
    %2359 = vmatprep.subr.bf16.mxu0 %v1369
    %2360 = vmatpush1.bf16.msra.mxu0 %v1368
    %2361 = vmatprep.subr.bf16.mxu0 %v1365
    %2362 = vmatpush1.bf16.msra.mxu0 %v1364
    %2363 = vmatprep.subr.bf16.mxu0 %v1361
    %2364 = vmatpush1.bf16.msra.mxu0 %v1360
    %2365 = vmatprep.subr.bf16.mxu0 %v1357
    %2366 = vmatpush1.bf16.msra.mxu0 %v1356
    %2367 = vmatprep.subr.bf16.mxu0 %v1353
    %2368 = vmatpush1.bf16.msra.mxu0 %v1352
    %2369 = vmatprep.subr.bf16.mxu0 %v1349
    %2370 = vmatpush1.bf16.msra.mxu0 %v1348
    %2371 = vmatprep.subr.bf16.mxu0 %v1409
    %2372 = vmatpush2.bf16.msra.mxu0 %v1408
    %2373 = vmatprep.subr.bf16.mxu0 %v1405
    %2374 = vmatpush2.bf16.msra.mxu0 %v1404
    %2375 = vmatprep.subr.bf16.mxu0 %v1401
    %2376 = vmatpush2.bf16.msra.mxu0 %v1400
    %2377 = vmatprep.subr.bf16.mxu0 %v1397
    %2378 = vmatpush2.bf16.msra.mxu0 %v1396
    %2379 = vmatprep.subr.bf16.mxu0 %v1393
    %2380 = vmatpush2.bf16.msra.mxu0 %v1392
    %2381 = vmatprep.subr.bf16.mxu0 %v1389
    %2382 = vmatpush2.bf16.msra.mxu0 %v1388
    %2383 = vmatprep.subr.bf16.mxu0 %v1385
    %2384 = vmatpush2.bf16.msra.mxu0 %v1384
    %2385 = vmatprep.subr.bf16.mxu0 %v1381
    %2386 = vmatpush2.bf16.msra.mxu0 %v1380
    %2387 = vmatprep.mubr.bf16.mxu0 %v2067
    %2388 = vmatmul.mubr.bf16.gmra.mxu0 %v2066
    %v2389 = vpop.f32.mrf.mxu0
    %v2390 = vadd.f32 %v2349, %v2389
    %v2391 = vpop.f32.mrf.mxu0
    %v2392 = vadd.f32 %v2351, %v2391
    %v2393 = vpop.f32.mrf.mxu0
    %v2394 = vpop.f32.mrf.mxu0
    %2395 = vdwg.mxu0
    %v2396 = vmul.f32 %v2226, %v2226
    %v2397 = vmul.f32 %v2228, %v2228
    %v2398 = vmul.f32 %v2390, %v2390
    %v2399 = vmul.f32 %v2392, %v2392
    %v2400 = vsel %vm1998, %v2396, 0.0
    %v2401 = vsel %vm1998, %v2397, 0.0
    %v2402 = vadd.f32 %v2400, %v2401
    %v2403 = vsel %vm1998, %v2398, 0.0
    %v2404 = vadd.f32 %v2402, %v2403
    %v2405 = vsel %vm1998, %v2399, 0.0
    %v2406 = vadd.f32 %v2404, %v2405
    %2407 = vadd.xlane.f32.xlu0 %v2406
    %v2408 = vpop.xlane.xlu0 %2407
    %v2409 = vmax.f32 %v2408, 1e-24
    %v2410 = vrsqrt.pop %v2409
    %v2411 = vmul.f32 %v2226, %v2410
    %v2412 = vmul.f32 %v2228, %v2410
    %v2413 = vmul.f32 %v2390, %v2410
    %v2414 = vmul.f32 %v2392, %v2410
    %v2415 = vsub.f32 %v2010, %v2411
    %v2416 = vsub.f32 %v2011, %v2412
    %v2417 = vsub.f32 %v2012, %v2413
    %v2418 = vsub.f32 %v2013, %v2414
    %v2419 = vand.u32 2147483647, %v2415
    %v2420 = vand.u32 2147483647, %v2416
    %v2421 = vand.u32 2147483647, %v2417
    %v2422 = vand.u32 2147483647, %v2418
    %v2423 = vmul.f32 %v2010, %v2411
    %v2424 = vmul.f32 %v2011, %v2412
    %v2425 = vmul.f32 %v2012, %v2413
    %v2426 = vmul.f32 %v2013, %v2414
    %v2427 = vpack.c.bf16 %v2419, %v2419
    %v2428 = vpack.c.bf16 %v2420, %v2420
    %v2429 = vpack.c.bf16 %v2421, %v2421
    %v2430 = vpack.c.bf16 %v2422, %v2422
    %v2431 = vpack.c.bf16 %v2423, %v2423
    %v2432 = vpack.c.bf16 %v2424, %v2424
    %v2433 = vpack.c.bf16 %v2425, %v2425
    %v2434 = vpack.c.bf16 %v2426, %v2426
    %v2435 = vld [vmem:[#allocation9] sm:$0xff]
    %v2436 = vld [vmem:[#allocation9 + $0x8] sm:$0xff]
    %v2437 = vld [vmem:[#allocation9 + $0x10] sm:$0xff]
    %v2438 = vld [vmem:[#allocation9 + $0x18] sm:$0xff]
    %v2439 = vld [vmem:[#allocation9 + $0x20] sm:$0xff]
    %v2440 = vld [vmem:[#allocation9 + $0x28] sm:$0xff]
    %v2441 = vld [vmem:[#allocation9 + $0x30] sm:$0xff]
    %v2442 = vld [vmem:[#allocation9 + $0x38] sm:$0xff]
    %v2443 = vld [vmem:[#allocation9 + $0x40] sm:$0xff]
    %v2444 = vld [vmem:[#allocation9 + $0x48] sm:$0xff]
    %v2445 = vld [vmem:[#allocation9 + $0x50] sm:$0xff]
    %v2446 = vld [vmem:[#allocation9 + $0x58] sm:$0xff]
    %v2447 = vld [vmem:[#allocation9 + $0x60] sm:$0xff]
    %v2448 = vld [vmem:[#allocation9 + $0x68] sm:$0xff]
    %v2449 = vld [vmem:[#allocation9 + $0x70] sm:$0xff]
    %v2450 = vld [vmem:[#allocation9 + $0x78] sm:$0xff]
    %v2451 = vld [vmem:[#allocation9 + $0x80] sm:$0xff]
    %v2452 = vld [vmem:[#allocation9 + $0x88] sm:$0xff]
    %v2453 = vld [vmem:[#allocation9 + $0x90] sm:$0xff]
    %v2454 = vld [vmem:[#allocation9 + $0x98] sm:$0xff]
    %v2455 = vld [vmem:[#allocation9 + $0xa0] sm:$0xff]
    %v2456 = vld [vmem:[#allocation9 + $0xa8] sm:$0xff]
    %v2457 = vld [vmem:[#allocation9 + $0xb0] sm:$0xff]
    %v2458 = vld [vmem:[#allocation9 + $0xb8] sm:$0xff]
    %v2459 = vld [vmem:[#allocation9 + $0xc0] sm:$0xff]
    %v2460 = vld [vmem:[#allocation9 + $0xc8] sm:$0xff]
    %v2461 = vld [vmem:[#allocation9 + $0xd0] sm:$0xff]
    %v2462 = vld [vmem:[#allocation9 + $0xd8] sm:$0xff]
    %v2463 = vld [vmem:[#allocation9 + $0xe0] sm:$0xff]
    %v2464 = vld [vmem:[#allocation9 + $0xe8] sm:$0xff]
    %v2465 = vld [vmem:[#allocation9 + $0xf0] sm:$0xff]
    %v2466 = vld [vmem:[#allocation9 + $0xf8] sm:$0xff]
    %v2467 = vld [vmem:[#allocation9 + $0x100] sm:$0xff]
    %v2468 = vld [vmem:[#allocation9 + $0x108] sm:$0xff]
    %v2469 = vld [vmem:[#allocation9 + $0x110] sm:$0xff]
    %v2470 = vld [vmem:[#allocation9 + $0x118] sm:$0xff]
    %v2471 = vld [vmem:[#allocation9 + $0x120] sm:$0xff]
    %v2472 = vld [vmem:[#allocation9 + $0x128] sm:$0xff]
    %v2473 = vld [vmem:[#allocation9 + $0x130] sm:$0xff]
    %v2474 = vld [vmem:[#allocation9 + $0x138] sm:$0xff]
    %v2475 = vld [vmem:[#allocation9 + $0x140] sm:$0xff]
    %v2476 = vld [vmem:[#allocation9 + $0x148] sm:$0xff]
    %v2477 = vld [vmem:[#allocation9 + $0x150] sm:$0xff]
    %v2478 = vld [vmem:[#allocation9 + $0x158] sm:$0xff]
    %v2479 = vld [vmem:[#allocation9 + $0x160] sm:$0xff]
    %v2480 = vld [vmem:[#allocation9 + $0x168] sm:$0xff]
    %v2481 = vld [vmem:[#allocation9 + $0x170] sm:$0xff]
    %v2482 = vld [vmem:[#allocation9 + $0x178] sm:$0xff]
    %v2483 = vld [vmem:[#allocation9 + $0x180] sm:$0xff]
    %v2484 = vld [vmem:[#allocation9 + $0x188] sm:$0xff]
    %v2485 = vld [vmem:[#allocation9 + $0x190] sm:$0xff]
    %v2486 = vld [vmem:[#allocation9 + $0x198] sm:$0xff]
    %v2487 = vld [vmem:[#allocation9 + $0x1a0] sm:$0xff]
    %v2488 = vld [vmem:[#allocation9 + $0x1a8] sm:$0xff]
    %v2489 = vld [vmem:[#allocation9 + $0x1b0] sm:$0xff]
    %v2490 = vld [vmem:[#allocation9 + $0x1b8] sm:$0xff]
    %v2491 = vld [vmem:[#allocation9 + $0x1c0] sm:$0xff]
    %v2492 = vld [vmem:[#allocation9 + $0x1c8] sm:$0xff]
    %v2493 = vld [vmem:[#allocation9 + $0x1d0] sm:$0xff]
    %v2494 = vld [vmem:[#allocation9 + $0x1d8] sm:$0xff]
    %v2495 = vld [vmem:[#allocation9 + $0x1e0] sm:$0xff]
    %v2496 = vld [vmem:[#allocation9 + $0x1e8] sm:$0xff]
    %v2497 = vld [vmem:[#allocation9 + $0x1f0] sm:$0xff]
    %v2498 = vld [vmem:[#allocation9 + $0x1f8] sm:$0xff]
    %v2499 = vld [vmem:[#allocation9 + $0x200] sm:$0xff]
    %v2500 = vld [vmem:[#allocation9 + $0x208] sm:$0xff]
    %v2501 = vld [vmem:[#allocation9 + $0x210] sm:$0xff]
    %v2502 = vld [vmem:[#allocation9 + $0x218] sm:$0xff]
    %v2503 = vld [vmem:[#allocation9 + $0x220] sm:$0xff]
    %v2504 = vld [vmem:[#allocation9 + $0x228] sm:$0xff]
    %v2505 = vld [vmem:[#allocation9 + $0x230] sm:$0xff]
    %v2506 = vld [vmem:[#allocation9 + $0x238] sm:$0xff]
    %v2507 = vld [vmem:[#allocation9 + $0x240] sm:$0xff]
    %v2508 = vld [vmem:[#allocation9 + $0x248] sm:$0xff]
    %v2509 = vld [vmem:[#allocation9 + $0x250] sm:$0xff]
    %v2510 = vld [vmem:[#allocation9 + $0x258] sm:$0xff]
    %v2511 = vld [vmem:[#allocation9 + $0x260] sm:$0xff]
    %v2512 = vld [vmem:[#allocation9 + $0x268] sm:$0xff]
    %v2513 = vld [vmem:[#allocation9 + $0x270] sm:$0xff]
    %v2514 = vld [vmem:[#allocation9 + $0x278] sm:$0xff]
    %v2515 = vld [vmem:[#allocation9 + $0x280] sm:$0xff]
    %v2516 = vld [vmem:[#allocation9 + $0x288] sm:$0xff]
    %v2517 = vld [vmem:[#allocation9 + $0x290] sm:$0xff]
    %v2518 = vld [vmem:[#allocation9 + $0x298] sm:$0xff]
    %v2519 = vld [vmem:[#allocation9 + $0x2a0] sm:$0xff]
    %v2520 = vld [vmem:[#allocation9 + $0x2a8] sm:$0xff]
    %v2521 = vld [vmem:[#allocation9 + $0x2b0] sm:$0xff]
    %v2522 = vld [vmem:[#allocation9 + $0x2b8] sm:$0xff]
    %v2523 = vld [vmem:[#allocation9 + $0x2c0] sm:$0xff]
    %v2524 = vld [vmem:[#allocation9 + $0x2c8] sm:$0xff]
    %v2525 = vld [vmem:[#allocation9 + $0x2d0] sm:$0xff]
    %v2526 = vld [vmem:[#allocation9 + $0x2d8] sm:$0xff]
    %v2527 = vld [vmem:[#allocation9 + $0x2e0] sm:$0xff]
    %v2528 = vld [vmem:[#allocation9 + $0x2e8] sm:$0xff]
    %v2529 = vld [vmem:[#allocation9 + $0x2f0] sm:$0xff]
    %v2530 = vld [vmem:[#allocation9 + $0x2f8] sm:$0xff]
    %v2531 = vld [vmem:[#allocation9 + $0x300] sm:$0xff]
    %v2532 = vld [vmem:[#allocation9 + $0x308] sm:$0xff]
    %v2533 = vld [vmem:[#allocation9 + $0x310] sm:$0xff]
    %v2534 = vld [vmem:[#allocation9 + $0x318] sm:$0xff]
    %v2535 = vld [vmem:[#allocation9 + $0x320] sm:$0xff]
    %v2536 = vld [vmem:[#allocation9 + $0x328] sm:$0xff]
    %v2537 = vld [vmem:[#allocation9 + $0x330] sm:$0xff]
    %v2538 = vld [vmem:[#allocation9 + $0x338] sm:$0xff]
    %v2539 = vld [vmem:[#allocation9 + $0x340] sm:$0xff]
    %v2540 = vld [vmem:[#allocation9 + $0x348] sm:$0xff]
    %v2541 = vld [vmem:[#allocation9 + $0x350] sm:$0xff]
    %v2542 = vld [vmem:[#allocation9 + $0x358] sm:$0xff]
    %v2543 = vld [vmem:[#allocation9 + $0x360] sm:$0xff]
    %v2544 = vld [vmem:[#allocation9 + $0x368] sm:$0xff]
    %v2545 = vld [vmem:[#allocation9 + $0x370] sm:$0xff]
    %v2546 = vld [vmem:[#allocation9 + $0x378] sm:$0xff]
    %v2547 = vld [vmem:[#allocation9 + $0x380] sm:$0xff]
    %v2548 = vld [vmem:[#allocation9 + $0x388] sm:$0xff]
    %v2549 = vld [vmem:[#allocation9 + $0x390] sm:$0xff]
    %v2550 = vld [vmem:[#allocation9 + $0x398] sm:$0xff]
    %v2551 = vld [vmem:[#allocation9 + $0x3a0] sm:$0xff]
    %v2552 = vld [vmem:[#allocation9 + $0x3a8] sm:$0xff]
    %v2553 = vld [vmem:[#allocation9 + $0x3b0] sm:$0xff]
    %v2554 = vld [vmem:[#allocation9 + $0x3b8] sm:$0xff]
    %v2555 = vld [vmem:[#allocation9 + $0x3c0] sm:$0xff]
    %v2556 = vld [vmem:[#allocation9 + $0x3c8] sm:$0xff]
    %v2557 = vld [vmem:[#allocation9 + $0x3d0] sm:$0xff]
    %v2558 = vld [vmem:[#allocation9 + $0x3d8] sm:$0xff]
    %v2559 = vld [vmem:[#allocation9 + $0x3e0] sm:$0xff]
    %v2560 = vld [vmem:[#allocation9 + $0x3e8] sm:$0xff]
    %v2561 = vld [vmem:[#allocation9 + $0x3f0] sm:$0xff]
    %v2562 = vld [vmem:[#allocation9 + $0x3f8] sm:$0xff]
    %v2563 = vld [vmem:[%s4] ss:$2 sm:$0x3]
    %v2565 = vlaneseq
    %v2566 = vshrl.u32 %v2565, 7
    %v2567 = vsub.s32 0, %v2566
    %v2568 = vrot.slane %v2563, %v2567
    %v2569 = vlaneseq
    %v2570 = vshrl.u32 %v2569, 7
    %v2571 = vsub.s32 1, %v2570
    %v2572 = vrot.slane %v2563, %v2571
    %v2703 = vunpack.c.l.b16 %v2435
    %v2704 = vunpack.c.h.b16 %v2435
    %v2705 = vunpack.c.l.b16 %v2436
    %v2706 = vunpack.c.h.b16 %v2436
    %v2707 = vunpack.c.l.b16 %v2437
    %v2708 = vunpack.c.h.b16 %v2437
    %v2709 = vunpack.c.l.b16 %v2438
    %v2710 = vunpack.c.h.b16 %v2438
    %v2711 = vunpack.c.l.b16 %v2439
    %v2712 = vunpack.c.h.b16 %v2439
    %v2713 = vunpack.c.l.b16 %v2440
    %v2714 = vunpack.c.h.b16 %v2440
    %v2715 = vunpack.c.l.b16 %v2441
    %v2716 = vunpack.c.h.b16 %v2441
    %v2717 = vunpack.c.l.b16 %v2442
    %v2718 = vunpack.c.h.b16 %v2442
    %v2719 = vunpack.c.l.b16 %v2443
    %v2720 = vunpack.c.h.b16 %v2443
    %v2721 = vunpack.c.l.b16 %v2444
    %v2722 = vunpack.c.h.b16 %v2444
    %v2723 = vunpack.c.l.b16 %v2445
    %v2724 = vunpack.c.h.b16 %v2445
    %v2725 = vunpack.c.l.b16 %v2446
    %v2726 = vunpack.c.h.b16 %v2446
    %v2727 = vunpack.c.l.b16 %v2447
    %v2728 = vunpack.c.h.b16 %v2447
    %v2729 = vunpack.c.l.b16 %v2448
    %v2730 = vunpack.c.h.b16 %v2448
    %v2731 = vunpack.c.l.b16 %v2449
    %v2732 = vunpack.c.h.b16 %v2449
    %v2733 = vunpack.c.l.b16 %v2450
    %v2734 = vunpack.c.h.b16 %v2450
    %v2735 = vunpack.c.l.b16 %v2451
    %v2736 = vunpack.c.h.b16 %v2451
    %v2737 = vunpack.c.l.b16 %v2452
    %v2738 = vunpack.c.h.b16 %v2452
    %v2739 = vunpack.c.l.b16 %v2453
    %v2740 = vunpack.c.h.b16 %v2453
    %v2741 = vunpack.c.l.b16 %v2454
    %v2742 = vunpack.c.h.b16 %v2454
    %v2743 = vunpack.c.l.b16 %v2455
    %v2744 = vunpack.c.h.b16 %v2455
    %v2745 = vunpack.c.l.b16 %v2456
    %v2746 = vunpack.c.h.b16 %v2456
    %v2747 = vunpack.c.l.b16 %v2457
    %v2748 = vunpack.c.h.b16 %v2457
    %v2749 = vunpack.c.l.b16 %v2458
    %v2750 = vunpack.c.h.b16 %v2458
    %v2751 = vunpack.c.l.b16 %v2459
    %v2752 = vunpack.c.h.b16 %v2459
    %v2753 = vunpack.c.l.b16 %v2460
    %v2754 = vunpack.c.h.b16 %v2460
    %v2755 = vunpack.c.l.b16 %v2461
    %v2756 = vunpack.c.h.b16 %v2461
    %v2757 = vunpack.c.l.b16 %v2462
    %v2758 = vunpack.c.h.b16 %v2462
    %v2759 = vunpack.c.l.b16 %v2463
    %v2760 = vunpack.c.h.b16 %v2463
    %v2761 = vunpack.c.l.b16 %v2464
    %v2762 = vunpack.c.h.b16 %v2464
    %v2763 = vunpack.c.l.b16 %v2465
    %v2764 = vunpack.c.h.b16 %v2465
    %v2765 = vunpack.c.l.b16 %v2466
    %v2766 = vunpack.c.h.b16 %v2466
    %v2767 = vunpack.c.l.b16 %v2467
    %v2768 = vunpack.c.h.b16 %v2467
    %v2769 = vunpack.c.l.b16 %v2468
    %v2770 = vunpack.c.h.b16 %v2468
    %v2771 = vunpack.c.l.b16 %v2469
    %v2772 = vunpack.c.h.b16 %v2469
    %v2773 = vunpack.c.l.b16 %v2470
    %v2774 = vunpack.c.h.b16 %v2470
    %v2775 = vunpack.c.l.b16 %v2471
    %v2776 = vunpack.c.h.b16 %v2471
    %v2777 = vunpack.c.l.b16 %v2472
    %v2778 = vunpack.c.h.b16 %v2472
    %v2779 = vunpack.c.l.b16 %v2473
    %v2780 = vunpack.c.h.b16 %v2473
    %v2781 = vunpack.c.l.b16 %v2474
    %v2782 = vunpack.c.h.b16 %v2474
    %v2783 = vunpack.c.l.b16 %v2475
    %v2784 = vunpack.c.h.b16 %v2475
    %v2785 = vunpack.c.l.b16 %v2476
    %v2786 = vunpack.c.h.b16 %v2476
    %v2787 = vunpack.c.l.b16 %v2477
    %v2788 = vunpack.c.h.b16 %v2477
    %v2789 = vunpack.c.l.b16 %v2478
    %v2790 = vunpack.c.h.b16 %v2478
    %v2791 = vunpack.c.l.b16 %v2479
    %v2792 = vunpack.c.h.b16 %v2479
    %v2793 = vunpack.c.l.b16 %v2480
    %v2794 = vunpack.c.h.b16 %v2480
    %v2795 = vunpack.c.l.b16 %v2481
    %v2796 = vunpack.c.h.b16 %v2481
    %v2797 = vunpack.c.l.b16 %v2482
    %v2798 = vunpack.c.h.b16 %v2482
    %v2799 = vunpack.c.l.b16 %v2483
    %v2800 = vunpack.c.h.b16 %v2483
    %v2801 = vunpack.c.l.b16 %v2484
    %v2802 = vunpack.c.h.b16 %v2484
    %v2803 = vunpack.c.l.b16 %v2485
    %v2804 = vunpack.c.h.b16 %v2485
    %v2805 = vunpack.c.l.b16 %v2486
    %v2806 = vunpack.c.h.b16 %v2486
    %v2807 = vunpack.c.l.b16 %v2487
    %v2808 = vunpack.c.h.b16 %v2487
    %v2809 = vunpack.c.l.b16 %v2488
    %v2810 = vunpack.c.h.b16 %v2488
    %v2811 = vunpack.c.l.b16 %v2489
    %v2812 = vunpack.c.h.b16 %v2489
    %v2813 = vunpack.c.l.b16 %v2490
    %v2814 = vunpack.c.h.b16 %v2490
    %v2815 = vunpack.c.l.b16 %v2491
    %v2816 = vunpack.c.h.b16 %v2491
    %v2817 = vunpack.c.l.b16 %v2492
    %v2818 = vunpack.c.h.b16 %v2492
    %v2819 = vunpack.c.l.b16 %v2493
    %v2820 = vunpack.c.h.b16 %v2493
    %v2821 = vunpack.c.l.b16 %v2494
    %v2822 = vunpack.c.h.b16 %v2494
    %v2823 = vunpack.c.l.b16 %v2495
    %v2824 = vunpack.c.h.b16 %v2495
    %v2825 = vunpack.c.l.b16 %v2496
    %v2826 = vunpack.c.h.b16 %v2496
    %v2827 = vunpack.c.l.b16 %v2497
    %v2828 = vunpack.c.h.b16 %v2497
    %v2829 = vunpack.c.l.b16 %v2498
    %v2830 = vunpack.c.h.b16 %v2498
    %v2831 = vunpack.c.l.b16 %v2499
    %v2832 = vunpack.c.h.b16 %v2499
    %v2833 = vunpack.c.l.b16 %v2500
    %v2834 = vunpack.c.h.b16 %v2500
    %v2835 = vunpack.c.l.b16 %v2501
    %v2836 = vunpack.c.h.b16 %v2501
    %v2837 = vunpack.c.l.b16 %v2502
    %v2838 = vunpack.c.h.b16 %v2502
    %v2839 = vunpack.c.l.b16 %v2503
    %v2840 = vunpack.c.h.b16 %v2503
    %v2841 = vunpack.c.l.b16 %v2504
    %v2842 = vunpack.c.h.b16 %v2504
    %v2843 = vunpack.c.l.b16 %v2505
    %v2844 = vunpack.c.h.b16 %v2505
    %v2845 = vunpack.c.l.b16 %v2506
    %v2846 = vunpack.c.h.b16 %v2506
    %v2847 = vunpack.c.l.b16 %v2507
    %v2848 = vunpack.c.h.b16 %v2507
    %v2849 = vunpack.c.l.b16 %v2508
    %v2850 = vunpack.c.h.b16 %v2508
    %v2851 = vunpack.c.l.b16 %v2509
    %v2852 = vunpack.c.h.b16 %v2509
    %v2853 = vunpack.c.l.b16 %v2510
    %v2854 = vunpack.c.h.b16 %v2510
    %v2855 = vunpack.c.l.b16 %v2511
    %v2856 = vunpack.c.h.b16 %v2511
    %v2857 = vunpack.c.l.b16 %v2512
    %v2858 = vunpack.c.h.b16 %v2512
    %v2859 = vunpack.c.l.b16 %v2513
    %v2860 = vunpack.c.h.b16 %v2513
    %v2861 = vunpack.c.l.b16 %v2514
    %v2862 = vunpack.c.h.b16 %v2514
    %v2863 = vunpack.c.l.b16 %v2515
    %v2864 = vunpack.c.h.b16 %v2515
    %v2865 = vunpack.c.l.b16 %v2516
    %v2866 = vunpack.c.h.b16 %v2516
    %v2867 = vunpack.c.l.b16 %v2517
    %v2868 = vunpack.c.h.b16 %v2517
    %v2869 = vunpack.c.l.b16 %v2518
    %v2870 = vunpack.c.h.b16 %v2518
    %v2871 = vunpack.c.l.b16 %v2519
    %v2872 = vunpack.c.h.b16 %v2519
    %v2873 = vunpack.c.l.b16 %v2520
    %v2874 = vunpack.c.h.b16 %v2520
    %v2875 = vunpack.c.l.b16 %v2521
    %v2876 = vunpack.c.h.b16 %v2521
    %v2877 = vunpack.c.l.b16 %v2522
    %v2878 = vunpack.c.h.b16 %v2522
    %v2879 = vunpack.c.l.b16 %v2523
    %v2880 = vunpack.c.h.b16 %v2523
    %v2881 = vunpack.c.l.b16 %v2524
    %v2882 = vunpack.c.h.b16 %v2524
    %v2883 = vunpack.c.l.b16 %v2525
    %v2884 = vunpack.c.h.b16 %v2525
    %v2885 = vunpack.c.l.b16 %v2526
    %v2886 = vunpack.c.h.b16 %v2526
    %v2887 = vunpack.c.l.b16 %v2527
    %v2888 = vunpack.c.h.b16 %v2527
    %v2889 = vunpack.c.l.b16 %v2528
    %v2890 = vunpack.c.h.b16 %v2528
    %v2891 = vunpack.c.l.b16 %v2529
    %v2892 = vunpack.c.h.b16 %v2529
    %v2893 = vunpack.c.l.b16 %v2530
    %v2894 = vunpack.c.h.b16 %v2530
    %v2895 = vunpack.c.l.b16 %v2531
    %v2896 = vunpack.c.h.b16 %v2531
    %v2897 = vunpack.c.l.b16 %v2532
    %v2898 = vunpack.c.h.b16 %v2532
    %v2899 = vunpack.c.l.b16 %v2533
    %v2900 = vunpack.c.h.b16 %v2533
    %v2901 = vunpack.c.l.b16 %v2534
    %v2902 = vunpack.c.h.b16 %v2534
    %v2903 = vunpack.c.l.b16 %v2535
    %v2904 = vunpack.c.h.b16 %v2535
    %v2905 = vunpack.c.l.b16 %v2536
    %v2906 = vunpack.c.h.b16 %v2536
    %v2907 = vunpack.c.l.b16 %v2537
    %v2908 = vunpack.c.h.b16 %v2537
    %v2909 = vunpack.c.l.b16 %v2538
    %v2910 = vunpack.c.h.b16 %v2538
    %v2911 = vunpack.c.l.b16 %v2539
    %v2912 = vunpack.c.h.b16 %v2539
    %v2913 = vunpack.c.l.b16 %v2540
    %v2914 = vunpack.c.h.b16 %v2540
    %v2915 = vunpack.c.l.b16 %v2541
    %v2916 = vunpack.c.h.b16 %v2541
    %v2917 = vunpack.c.l.b16 %v2542
    %v2918 = vunpack.c.h.b16 %v2542
    %v2919 = vunpack.c.l.b16 %v2543
    %v2920 = vunpack.c.h.b16 %v2543
    %v2921 = vunpack.c.l.b16 %v2544
    %v2922 = vunpack.c.h.b16 %v2544
    %v2923 = vunpack.c.l.b16 %v2545
    %v2924 = vunpack.c.h.b16 %v2545
    %v2925 = vunpack.c.l.b16 %v2546
    %v2926 = vunpack.c.h.b16 %v2546
    %v2927 = vunpack.c.l.b16 %v2547
    %v2928 = vunpack.c.h.b16 %v2547
    %v2929 = vunpack.c.l.b16 %v2548
    %v2930 = vunpack.c.h.b16 %v2548
    %v2931 = vunpack.c.l.b16 %v2549
    %v2932 = vunpack.c.h.b16 %v2549
    %v2933 = vunpack.c.l.b16 %v2550
    %v2934 = vunpack.c.h.b16 %v2550
    %v2935 = vunpack.c.l.b16 %v2551
    %v2936 = vunpack.c.h.b16 %v2551
    %v2937 = vunpack.c.l.b16 %v2552
    %v2938 = vunpack.c.h.b16 %v2552
    %v2939 = vunpack.c.l.b16 %v2553
    %v2940 = vunpack.c.h.b16 %v2553
    %v2941 = vunpack.c.l.b16 %v2554
    %v2942 = vunpack.c.h.b16 %v2554
    %v2943 = vunpack.c.l.b16 %v2555
    %v2944 = vunpack.c.h.b16 %v2555
    %v2945 = vunpack.c.l.b16 %v2556
    %v2946 = vunpack.c.h.b16 %v2556
    %v2947 = vunpack.c.l.b16 %v2557
    %v2948 = vunpack.c.h.b16 %v2557
    %v2949 = vunpack.c.l.b16 %v2558
    %v2950 = vunpack.c.h.b16 %v2558
    %v2951 = vunpack.c.l.b16 %v2559
    %v2952 = vunpack.c.h.b16 %v2559
    %v2953 = vunpack.c.l.b16 %v2560
    %v2954 = vunpack.c.h.b16 %v2560
    %v2955 = vunpack.c.l.b16 %v2561
    %v2956 = vunpack.c.h.b16 %v2561
    %v2957 = vunpack.c.l.b16 %v2562
    %v2958 = vunpack.c.h.b16 %v2562
    %v2959 = vpack.c.b16 %v2705, %v2703
    %v2960 = vpack.c.b16 %v2706, %v2704
    %v2961 = vpack.c.b16 %v2709, %v2707
    %v2962 = vpack.c.b16 %v2710, %v2708
    %v2963 = vpack.c.b16 %v2713, %v2711
    %v2964 = vpack.c.b16 %v2714, %v2712
    %v2965 = vpack.c.b16 %v2717, %v2715
    %v2966 = vpack.c.b16 %v2718, %v2716
    %v2967 = vpack.c.b16 %v2721, %v2719
    %v2968 = vpack.c.b16 %v2722, %v2720
    %v2969 = vpack.c.b16 %v2725, %v2723
    %v2970 = vpack.c.b16 %v2726, %v2724
    %v2971 = vpack.c.b16 %v2729, %v2727
    %v2972 = vpack.c.b16 %v2730, %v2728
    %v2973 = vpack.c.b16 %v2733, %v2731
    %v2974 = vpack.c.b16 %v2734, %v2732
    %v2975 = vpack.c.b16 %v2737, %v2735
    %v2976 = vpack.c.b16 %v2738, %v2736
    %v2977 = vpack.c.b16 %v2741, %v2739
    %v2978 = vpack.c.b16 %v2742, %v2740
    %v2979 = vpack.c.b16 %v2745, %v2743
    %v2980 = vpack.c.b16 %v2746, %v2744
    %v2981 = vpack.c.b16 %v2749, %v2747
    %v2982 = vpack.c.b16 %v2750, %v2748
    %v2983 = vpack.c.b16 %v2753, %v2751
    %v2984 = vpack.c.b16 %v2754, %v2752
    %v2985 = vpack.c.b16 %v2757, %v2755
    %v2986 = vpack.c.b16 %v2758, %v2756
    %v2987 = vpack.c.b16 %v2761, %v2759
    %v2988 = vpack.c.b16 %v2762, %v2760
    %v2989 = vpack.c.b16 %v2765, %v2763
    %v2990 = vpack.c.b16 %v2766, %v2764
    %v2991 = vpack.c.b16 %v2769, %v2767
    %v2992 = vpack.c.b16 %v2770, %v2768
    %v2993 = vpack.c.b16 %v2773, %v2771
    %v2994 = vpack.c.b16 %v2774, %v2772
    %v2995 = vpack.c.b16 %v2777, %v2775
    %v2996 = vpack.c.b16 %v2778, %v2776
    %v2997 = vpack.c.b16 %v2781, %v2779
    %v2998 = vpack.c.b16 %v2782, %v2780
    %v2999 = vpack.c.b16 %v2785, %v2783
    %v3000 = vpack.c.b16 %v2786, %v2784
    %v3001 = vpack.c.b16 %v2789, %v2787
    %v3002 = vpack.c.b16 %v2790, %v2788
    %v3003 = vpack.c.b16 %v2793, %v2791
    %v3004 = vpack.c.b16 %v2794, %v2792
    %v3005 = vpack.c.b16 %v2797, %v2795
    %v3006 = vpack.c.b16 %v2798, %v2796
    %v3007 = vpack.c.b16 %v2801, %v2799
    %v3008 = vpack.c.b16 %v2802, %v2800
    %v3009 = vpack.c.b16 %v2805, %v2803
    %v3010 = vpack.c.b16 %v2806, %v2804
    %v3011 = vpack.c.b16 %v2809, %v2807
    %v3012 = vpack.c.b16 %v2810, %v2808
    %v3013 = vpack.c.b16 %v2813, %v2811
    %v3014 = vpack.c.b16 %v2814, %v2812
    %v3015 = vpack.c.b16 %v2817, %v2815
    %v3016 = vpack.c.b16 %v2818, %v2816
    %v3017 = vpack.c.b16 %v2821, %v2819
    %v3018 = vpack.c.b16 %v2822, %v2820
    %v3019 = vpack.c.b16 %v2825, %v2823
    %v3020 = vpack.c.b16 %v2826, %v2824
    %v3021 = vpack.c.b16 %v2829, %v2827
    %v3022 = vpack.c.b16 %v2830, %v2828
    %v3023 = vpack.c.b16 %v2833, %v2831
    %v3024 = vpack.c.b16 %v2834, %v2832
    %v3025 = vpack.c.b16 %v2837, %v2835
    %v3026 = vpack.c.b16 %v2838, %v2836
    %v3027 = vpack.c.b16 %v2841, %v2839
    %v3028 = vpack.c.b16 %v2842, %v2840
    %v3029 = vpack.c.b16 %v2845, %v2843
    %v3030 = vpack.c.b16 %v2846, %v2844
    %v3031 = vpack.c.b16 %v2849, %v2847
    %v3032 = vpack.c.b16 %v2850, %v2848
    %v3033 = vpack.c.b16 %v2853, %v2851
    %v3034 = vpack.c.b16 %v2854, %v2852
    %v3035 = vpack.c.b16 %v2857, %v2855
    %v3036 = vpack.c.b16 %v2858, %v2856
    %v3037 = vpack.c.b16 %v2861, %v2859
    %v3038 = vpack.c.b16 %v2862, %v2860
    %v3039 = vpack.c.b16 %v2865, %v2863
    %v3040 = vpack.c.b16 %v2866, %v2864
    %v3041 = vpack.c.b16 %v2869, %v2867
    %v3042 = vpack.c.b16 %v2870, %v2868
    %v3043 = vpack.c.b16 %v2873, %v2871
    %v3044 = vpack.c.b16 %v2874, %v2872
    %v3045 = vpack.c.b16 %v2877, %v2875
    %v3046 = vpack.c.b16 %v2878, %v2876
    %v3047 = vpack.c.b16 %v2881, %v2879
    %v3048 = vpack.c.b16 %v2882, %v2880
    %v3049 = vpack.c.b16 %v2885, %v2883
    %v3050 = vpack.c.b16 %v2886, %v2884
    %v3051 = vpack.c.b16 %v2889, %v2887
    %v3052 = vpack.c.b16 %v2890, %v2888
    %v3053 = vpack.c.b16 %v2893, %v2891
    %v3054 = vpack.c.b16 %v2894, %v2892
    %v3055 = vpack.c.b16 %v2897, %v2895
    %v3056 = vpack.c.b16 %v2898, %v2896
    %v3057 = vpack.c.b16 %v2901, %v2899
    %v3058 = vpack.c.b16 %v2902, %v2900
    %v3059 = vpack.c.b16 %v2905, %v2903
    %v3060 = vpack.c.b16 %v2906, %v2904
    %v3061 = vpack.c.b16 %v2909, %v2907
    %v3062 = vpack.c.b16 %v2910, %v2908
    %v3063 = vpack.c.b16 %v2913, %v2911
    %v3064 = vpack.c.b16 %v2914, %v2912
    %v3065 = vpack.c.b16 %v2917, %v2915
    %v3066 = vpack.c.b16 %v2918, %v2916
    %v3067 = vpack.c.b16 %v2921, %v2919
    %v3068 = vpack.c.b16 %v2922, %v2920
    %v3069 = vpack.c.b16 %v2925, %v2923
    %v3070 = vpack.c.b16 %v2926, %v2924
    %v3071 = vpack.c.b16 %v2929, %v2927
    %v3072 = vpack.c.b16 %v2930, %v2928
    %v3073 = vpack.c.b16 %v2933, %v2931
    %v3074 = vpack.c.b16 %v2934, %v2932
    %v3075 = vpack.c.b16 %v2937, %v2935
    %v3076 = vpack.c.b16 %v2938, %v2936
    %v3077 = vpack.c.b16 %v2941, %v2939
    %v3078 = vpack.c.b16 %v2942, %v2940
    %v3079 = vpack.c.b16 %v2945, %v2943
    %v3080 = vpack.c.b16 %v2946, %v2944
    %v3081 = vpack.c.b16 %v2949, %v2947
    %v3082 = vpack.c.b16 %v2950, %v2948
    %v3083 = vpack.c.b16 %v2953, %v2951
    %v3084 = vpack.c.b16 %v2954, %v2952
    %v3085 = vpack.c.b16 %v2957, %v2955
    %v3086 = vpack.c.b16 %v2958, %v2956
    %3215 = vmatprep.subr.bf16.mxu0 %v2974
    %3216 = vmatpush1.bf16.msra.mxu0 %v2973
    %3217 = vmatprep.subr.bf16.mxu0 %v2972
    %3218 = vmatpush1.bf16.msra.mxu0 %v2971
    %3219 = vmatprep.subr.bf16.mxu0 %v2970
    %3220 = vmatpush1.bf16.msra.mxu0 %v2969
    %3221 = vmatprep.subr.bf16.mxu0 %v2968
    %3222 = vmatpush1.bf16.msra.mxu0 %v2967
    %3223 = vmatprep.subr.bf16.mxu0 %v2966
    %3224 = vmatpush1.bf16.msra.mxu0 %v2965
    %3225 = vmatprep.subr.bf16.mxu0 %v2964
    %3226 = vmatpush1.bf16.msra.mxu0 %v2963
    %3227 = vmatprep.subr.bf16.mxu0 %v2962
    %3228 = vmatpush1.bf16.msra.mxu0 %v2961
    %3229 = vmatprep.subr.bf16.mxu0 %v2960
    %3230 = vmatpush1.bf16.msra.mxu0 %v2959
    %3231 = vmatprep.subr.bf16.mxu0 %v2990
    %3232 = vmatpush2.bf16.msra.mxu0 %v2989
    %3233 = vmatprep.subr.bf16.mxu0 %v2988
    %3234 = vmatpush2.bf16.msra.mxu0 %v2987
    %3235 = vmatprep.subr.bf16.mxu0 %v2986
    %3236 = vmatpush2.bf16.msra.mxu0 %v2985
    %3237 = vmatprep.subr.bf16.mxu0 %v2984
    %3238 = vmatpush2.bf16.msra.mxu0 %v2983
    %3239 = vmatprep.subr.bf16.mxu0 %v2982
    %3240 = vmatpush2.bf16.msra.mxu0 %v2981
    %3241 = vmatprep.subr.bf16.mxu0 %v2980
    %3242 = vmatpush2.bf16.msra.mxu0 %v2979
    %3243 = vmatprep.subr.bf16.mxu0 %v2978
    %3244 = vmatpush2.bf16.msra.mxu0 %v2977
    %3245 = vmatprep.subr.bf16.mxu0 %v2976
    %3246 = vmatpush2.bf16.msra.mxu0 %v2975
    %3247 = vmatprep.mubr.bf16.mxu0 %v2428
    %3248 = vmatmul.mubr.bf16.gmra.mxu0 %v2427
    %v3249 = vpop.f32.mrf.mxu0
    %v3250 = vadd.f32 %v2568, %v3249
    %v3251 = vpop.f32.mrf.mxu0
    %v3252 = vadd.f32 %v2572, %v3251
    %v3253 = vpop.f32.mrf.mxu0
    %v3254 = vpop.f32.mrf.mxu0
    %3255 = vdwg.mxu0
    %3256 = vmatprep.subr.bf16.mxu0 %v3006
    %3257 = vmatpush1.bf16.msra.mxu0 %v3005
    %3258 = vmatprep.subr.bf16.mxu0 %v3004
    %3259 = vmatpush1.bf16.msra.mxu0 %v3003
    %3260 = vmatprep.subr.bf16.mxu0 %v3002
    %3261 = vmatpush1.bf16.msra.mxu0 %v3001
    %3262 = vmatprep.subr.bf16.mxu0 %v3000
    %3263 = vmatpush1.bf16.msra.mxu0 %v2999
    %3264 = vmatprep.subr.bf16.mxu0 %v2998
    %3265 = vmatpush1.bf16.msra.mxu0 %v2997
    %3266 = vmatprep.subr.bf16.mxu0 %v2996
    %3267 = vmatpush1.bf16.msra.mxu0 %v2995
    %3268 = vmatprep.subr.bf16.mxu0 %v2994
    %3269 = vmatpush1.bf16.msra.mxu0 %v2993
    %3270 = vmatprep.subr.bf16.mxu0 %v2992
    %3271 = vmatpush1.bf16.msra.mxu0 %v2991
    %3272 = vmatprep.subr.bf16.mxu0 %v3022
    %3273 = vmatpush2.bf16.msra.mxu0 %v3021
    %3274 = vmatprep.subr.bf16.mxu0 %v3020
    %3275 = vmatpush2.bf16.msra.mxu0 %v3019
    %3276 = vmatprep.subr.bf16.mxu0 %v3018
    %3277 = vmatpush2.bf16.msra.mxu0 %v3017
    %3278 = vmatprep.subr.bf16.mxu0 %v3016
    %3279 = vmatpush2.bf16.msra.mxu0 %v3015
    %3280 = vmatprep.subr.bf16.mxu0 %v3014
    %3281 = vmatpush2.bf16.msra.mxu0 %v3013
    %3282 = vmatprep.subr.bf16.mxu0 %v3012
    %3283 = vmatpush2.bf16.msra.mxu0 %v3011
    %3284 = vmatprep.subr.bf16.mxu0 %v3010
    %3285 = vmatpush2.bf16.msra.mxu0 %v3009
    %3286 = vmatprep.subr.bf16.mxu0 %v3008
    %3287 = vmatpush2.bf16.msra.mxu0 %v3007
    %3288 = vmatprep.mubr.bf16.mxu0 %v2430
    %3289 = vmatmul.mubr.bf16.gmra.mxu0 %v2429
    %v3290 = vpop.f32.mrf.mxu0
    %v3291 = vadd.f32 %v3250, %v3290
    %v3292 = vpop.f32.mrf.mxu0
    %v3293 = vadd.f32 %v3252, %v3292
    %v3294 = vpop.f32.mrf.mxu0
    %v3295 = vpop.f32.mrf.mxu0
    %3296 = vdwg.mxu0
    %3297 = vmatprep.subr.bf16.mxu0 %v3038
    %3298 = vmatpush1.bf16.msra.mxu0 %v3037
    %3299 = vmatprep.subr.bf16.mxu0 %v3036
    %3300 = vmatpush1.bf16.msra.mxu0 %v3035
    %3301 = vmatprep.subr.bf16.mxu0 %v3034
    %3302 = vmatpush1.bf16.msra.mxu0 %v3033
    %3303 = vmatprep.subr.bf16.mxu0 %v3032
    %3304 = vmatpush1.bf16.msra.mxu0 %v3031
    %3305 = vmatprep.subr.bf16.mxu0 %v3030
    %3306 = vmatpush1.bf16.msra.mxu0 %v3029
    %3307 = vmatprep.subr.bf16.mxu0 %v3028
    %3308 = vmatpush1.bf16.msra.mxu0 %v3027
    %3309 = vmatprep.subr.bf16.mxu0 %v3026
    %3310 = vmatpush1.bf16.msra.mxu0 %v3025
    %3311 = vmatprep.subr.bf16.mxu0 %v3024
    %3312 = vmatpush1.bf16.msra.mxu0 %v3023
    %3313 = vmatprep.subr.bf16.mxu0 %v3054
    %3314 = vmatpush2.bf16.msra.mxu0 %v3053
    %3315 = vmatprep.subr.bf16.mxu0 %v3052
    %3316 = vmatpush2.bf16.msra.mxu0 %v3051
    %3317 = vmatprep.subr.bf16.mxu0 %v3050
    %3318 = vmatpush2.bf16.msra.mxu0 %v3049
    %3319 = vmatprep.subr.bf16.mxu0 %v3048
    %3320 = vmatpush2.bf16.msra.mxu0 %v3047
    %3321 = vmatprep.subr.bf16.mxu0 %v3046
    %3322 = vmatpush2.bf16.msra.mxu0 %v3045
    %3323 = vmatprep.subr.bf16.mxu0 %v3044
    %3324 = vmatpush2.bf16.msra.mxu0 %v3043
    %3325 = vmatprep.subr.bf16.mxu0 %v3042
    %3326 = vmatpush2.bf16.msra.mxu0 %v3041
    %3327 = vmatprep.subr.bf16.mxu0 %v3040
    %3328 = vmatpush2.bf16.msra.mxu0 %v3039
    %3329 = vmatprep.mubr.bf16.mxu0 %v2432
    %3330 = vmatmul.mubr.bf16.gmra.mxu0 %v2431
    %v3331 = vpop.f32.mrf.mxu0
    %v3332 = vadd.f32 %v3291, %v3331
    %v3333 = vpop.f32.mrf.mxu0
    %v3334 = vadd.f32 %v3293, %v3333
    %v3335 = vpop.f32.mrf.mxu0
    %v3336 = vpop.f32.mrf.mxu0
    %3337 = vdwg.mxu0
    %3338 = vmatprep.subr.bf16.mxu0 %v3070
    %3339 = vmatpush1.bf16.msra.mxu0 %v3069
    %3340 = vmatprep.subr.bf16.mxu0 %v3068
    %3341 = vmatpush1.bf16.msra.mxu0 %v3067
    %3342 = vmatprep.subr.bf16.mxu0 %v3066
    %3343 = vmatpush1.bf16.msra.mxu0 %v3065
    %3344 = vmatprep.subr.bf16.mxu0 %v3064
    %3345 = vmatpush1.bf16.msra.mxu0 %v3063
    %3346 = vmatprep.subr.bf16.mxu0 %v3062
    %3347 = vmatpush1.bf16.msra.mxu0 %v3061
    %3348 = vmatprep.subr.bf16.mxu0 %v3060
    %3349 = vmatpush1.bf16.msra.mxu0 %v3059
    %3350 = vmatprep.subr.bf16.mxu0 %v3058
    %3351 = vmatpush1.bf16.msra.mxu0 %v3057
    %3352 = vmatprep.subr.bf16.mxu0 %v3056
    %3353 = vmatpush1.bf16.msra.mxu0 %v3055
    %3354 = vmatprep.subr.bf16.mxu0 %v3086
    %3355 = vmatpush2.bf16.msra.mxu0 %v3085
    %3356 = vmatprep.subr.bf16.mxu0 %v3084
    %3357 = vmatpush2.bf16.msra.mxu0 %v3083
    %3358 = vmatprep.subr.bf16.mxu0 %v3082
    %3359 = vmatpush2.bf16.msra.mxu0 %v3081
    %3360 = vmatprep.subr.bf16.mxu0 %v3080
    %3361 = vmatpush2.bf16.msra.mxu0 %v3079
    %3362 = vmatprep.subr.bf16.mxu0 %v3078
    %3363 = vmatpush2.bf16.msra.mxu0 %v3077
    %3364 = vmatprep.subr.bf16.mxu0 %v3076
    %3365 = vmatpush2.bf16.msra.mxu0 %v3075
    %3366 = vmatprep.subr.bf16.mxu0 %v3074
    %3367 = vmatpush2.bf16.msra.mxu0 %v3073
    %3368 = vmatprep.subr.bf16.mxu0 %v3072
    %3369 = vmatpush2.bf16.msra.mxu0 %v3071
    %3370 = vmatprep.mubr.bf16.mxu0 %v2434
    %3371 = vmatmul.mubr.bf16.gmra.mxu0 %v2433
    %v3372 = vpop.f32.mrf.mxu0
    %v3373 = vadd.f32 %v3332, %v3372
    %v3374 = vpop.f32.mrf.mxu0
    %v3375 = vadd.f32 %v3334, %v3374
    %v3376 = vpop.f32.mrf.mxu0
    %v3377 = vpop.f32.mrf.mxu0
    %3378 = vdwg.mxu0
    %v3379 = vxor.u32 %v3373, 2147483648
    %v3380 = vxor.u32 %v3375, 2147483648
    %v3381 = vmul.f32 %v3379, 1.442695
    %v3382 = vpow.pop %v3381
    %v3383 = vmul.f32 %v3380, 1.442695
    %v3384 = vpow.pop %v3383
    %v3385 = vadd.f32 %v3382, 1.0
    %v3386 = vadd.f32 %v3384, 1.0
    %v3387 = vrcp.pop %v3385
    %v3388 = vmul.f32 1.0, %v3387
    %v3389 = vrcp.pop %v3386
    %v3390 = vmul.f32 1.0, %v3389
    %v3391 = vmul.f32 %v3373, %v3388
    %v3392 = vmul.f32 %v3375, %v3390
    %s3393 = scalar_lea.vmem %s4, 1
    %v3394 = vld [vmem:[%s3393] ss:$2 sm:$0x3]
    %v3396 = vlaneseq
    %v3397 = vshrl.u32 %v3396, 7
    %v3398 = vsub.s32 0, %v3397
    %v3399 = vrot.slane %v3394, %v3398
    %v3400 = vlaneseq
    %v3401 = vshrl.u32 %v3400, 7
    %v3402 = vsub.s32 1, %v3401
    %v3403 = vrot.slane %v3394, %v3402
    %v3406 = vmul.f32 %v3391, %v3399
    %v3407 = vmul.f32 %v3392, %v3403
    %v3408 = vsel %vm1998, %v3406, 0.0
    %v3409 = vsel %vm1998, %v3407, 0.0
    %v3410 = vadd.f32 %v3408, %v3409
    %3411 = vadd.xlane.f32.xlu0 %v3410
    %v3412 = vpop.xlane.xlu0 %3411
    %s3413 = sld [smem:[#allocation2]]
    %v3414 = vstv %s3413
    %v3415 = vadd.f32 %v3412, %v3414
    %3416 = vst [vmem:[#allocation11] sm:$0x3] %v3415
    // Predicated region
    $region42: #{tpu_custom_call.1} parent=1 // pred_check
      _
    $region43: #{tpu_custom_call.1} parent=1 // pred_check_branch
      %3418 = sbr.rel (0) target = $region45
    $region44: #{tpu_custom_call.1} parent=1 // pred_region
      %s3420 = ssub.s32 32, 32
      %3421 = vsyncadd [#allocation5], %s3420
      %s3423 = sshll.u32 [#allocation11], 4
      %s3424 = int_to_ptr.vmem [resolvable:$true] %s3423
      %3426 = dma.vmem_to_hbm [thread:$0]  %s3424, 32, %s6, [#allocation5]
    $region45: #{tpu_custom_call.1} parent=1 // pred_fallthru
      _
    // Predicated region
    $region46: #{tpu_custom_call.1} parent=1 // pred_check
      _
    $region47: #{tpu_custom_call.1} parent=1 // pred_check_branch
      %3428 = sbr.rel (0) target = $region49
    $region48: #{tpu_custom_call.1} parent=1 // pred_region
      %3429 = dma.done [#allocation5], 32
    $region49: #{tpu_custom_call.1} parent=1 // pred_fallthru
      _
    %3430 = vsyncpa [#allocation4], 1
    %3431 = vsyncpa [#allocation7], 1
    %3432 = vsyncpa [#allocation10], 1
    %3433 = vsyncpa [#allocation5], 1

</llo_original>
